<compile_context>
chip_gen: v5e
topology: v5e:2x2
jax: 0.10.0
libtpu: 0.0.40
codegen_flags: <defaults>
</compile_context>

<pallas_src>
import functools

import jax
import jax.numpy as jnp
from jax import lax
from jax.experimental import pallas as pl
from jax.experimental.pallas import tpu as pltpu


def _round_up(x, m):
    return ((x + m - 1) // m) * m


def bn_fold(gamma, beta, mean, var, eps=1e-5):
    scale = gamma / jnp.sqrt(var + eps)
    bias = beta - mean * scale
    return scale, bias


def _vmem_estimate(H, W, TH, Wbuf, Cin_p, Cout_p, K, pad):
    x_blk = H * W * Cin_p * 2                       # bf16, whole image per n
    out_blk = TH * W * Cout_p * 4                   # f32 output row tile
    w_blk = Cin_p * Cout_p * 2 + (K * K + 2) * Cout_p * 4
    scratch = (TH + 2 * pad) * Wbuf * Cout_p * 4    # f32 mid tile
    return 2 * (x_blk + out_blk + w_blk) + scratch  # blocks are double-buffered


def _pick_tile_h(H, W, Wbuf, Cin_p, Cout_p, K, pad, budget):
    # Largest divisor of H whose working set fits the VMEM budget: eliminates
    # (or minimizes) halo recompute and per-step grid overhead.
    for th in sorted((d for d in range(1, H + 1) if H % d == 0), reverse=True):
        if _vmem_estimate(H, W, th, Wbuf, Cin_p, Cout_p, K, pad) <= budget:
            return th
    return 1


def _pick_group(TH, W, Wbuf, C):
    # Row-group size for the depthwise stage: keep (loaded rows + rolled temp +
    # accumulator) comfortably inside the 64-vreg file (~48-vreg budget).
    per_row_bytes = (2 * Wbuf + W) * C * 4
    g = max(1, (48 * 4096) // per_row_bytes)
    g = min(g, 8, TH)
    while TH % g:
        g -= 1
    return g


# ----------------------------------------------------------------------------
# Fused kernel: 1x1 conv (+folded BN1) -> KxK depthwise (+folded BN2) -> ReLU
# ----------------------------------------------------------------------------
def _fused_kernel(x_ref, w1_ref, b1_ref, w2_ref, b2_ref, o_ref, mid_ref,
                  *, TH, W, Wbuf, K, pad, G):
    # x_ref  : (1, H, W, Cin_p)  bf16  whole image of one batch element
    # w1_ref : (Cin_p, Cout_p)   bf16  1x1 conv weight, BN1 scale folded in
    # b1_ref : (1, Cout_p)       f32   folded BN1 bias
    # w2_ref : (K*K, Cout_p)     f32   depthwise taps, BN2 scale folded in
    # b2_ref : (1, Cout_p)       f32   folded BN2 bias
    # o_ref  : (1, TH, W, Cout_p) f32  output row tile
    # mid_ref: (TH+2p, Wbuf, Cout_p) f32  conv1 output; cols [0,W) data,
    #          cols [W,Wbuf) zero (right pad, also absorbs roll wrap-around)
    h = pl.program_id(1)
    nH = pl.num_programs(1)
    C = mid_ref.shape[-1]

    # --- zero only what conv1 will not overwrite -----------------------------
    if Wbuf > W:
        mid_ref[:, W:, :] = jnp.zeros((TH + 2 * pad, Wbuf - W, C), jnp.float32)
    if pad > 0:
        @pl.when(h == 0)                     # top image border -> zero halo rows
        def _():
            mid_ref[0:pad, :W, :] = jnp.zeros((pad, W, C), jnp.float32)

        @pl.when(h == nH - 1)                # bottom image border
        def _():
            mid_ref[pad + TH:, :W, :] = jnp.zeros((pad, W, C), jnp.float32)

    # --- stage 1: 1x1 conv (+BN1 bias) on the MXU, bf16 in / f32 out ---------
    w1 = w1_ref[...]
    b1 = b1_ref[...]

    def pointwise_rows(row_start, n_rows, mid_row):
        xa = x_ref[0, pl.ds(row_start, n_rows), :, :]        # (n_rows, W, Cin_p) bf16
        xa = xa.reshape(n_rows * W, xa.shape[-1])
        y = jnp.dot(xa, w1, preferred_element_type=jnp.float32) + b1
        # Sublane-aligned store (column offset 0) -> unmasked vst path.
        mid_ref[mid_row:mid_row + n_rows, :W, :] = y.reshape(n_rows, W, C)

    start = h * TH
    if TH % 8 == 0:
        start = pl.multiple_of(start, 8)
    pointwise_rows(start, TH, pad)

    # Halo rows above / below are cheaply recomputed (never run when TH == H).
    if pad > 0:
        @pl.when(h > 0)
        def _():
            pointwise_rows(h * TH - pad, pad, 0)

        @pl.when(h < nH - 1)
        def _():
            pointwise_rows(h * TH + TH, pad, pad + TH)

    # --- stage 2: depthwise KxK + BN2 bias + ReLU, blocked over row groups ---
    w2 = w2_ref[...]                          # (K*K, C) f32
    b2 = b2_ref[...]                          # (1, C)   f32
    taps = [w2[t:t + 1, :] for t in range(K * K)]   # hoisted (1, C) taps

    def group_body(g, carry):
        r0 = g * G
        acc = None
        for dy in range(K):                   # static taps, unrolled
            rows = mid_ref[pl.ds(r0 + dy, G), :, :]          # (G, Wbuf, C) f32
            for dx in range(K):
                sh = (pad - dx) % Wbuf
                # dx shift via XLU rotation; wrap-around lands in the zero pad
                # columns [W, Wbuf), never in the kept output columns [0, W).
                shifted = pltpu.roll(rows, shift=sh, axis=1) if sh else rows
                term = shifted[:, :W, :] * taps[dy * K + dx]
                acc = term if acc is None else acc + term     # stays in vregs
        o_ref[0, pl.ds(r0, G), :, :] = jnp.maximum(acc + b2, 0.0)
        return carry

    nG = TH // G
    if nG <= 8:
        for g in range(nG):                   # fully static indices
            group_body(g, 0)
    else:
        lax.fori_loop(0, nG, group_body, 0, unroll=False)


# ----------------------------------------------------------------------------
# Module wrapper
# ----------------------------------------------------------------------------
def light_conv_bn_act(x_nchw, params, K):
    assert K % 2 == 1, "module uses stride-1 SAME padding with odd K"
    N, Cin, H, W = x_nchw.shape
    Cout = params["bn1_gamma"].shape[0]
    pad = (K - 1) // 2

    # Host-side (tiny tensors): fold BN scales into the conv weights.
    s1, b1 = bn_fold(params["bn1_gamma"], params["bn1_beta"],
                     params["bn1_mean"], params["bn1_var"])
    s2, b2 = bn_fold(params["bn2_gamma"], params["bn2_beta"],
                     params["bn2_mean"], params["bn2_var"])
    w1 = params["w1_ic_oc"] * s1[None, :]                       # (Cin, Cout)
    w2 = (params["w2_kkc"] * s2[None, None, :]).reshape(K * K, Cout)

    # Lane density: pad channel dims up to a multiple of 128.
    Cin_p, Cout_p = _round_up(Cin, 128), _round_up(Cout, 128)
    w1 = jnp.pad(w1, ((0, Cin_p - Cin), (0, Cout_p - Cout))).astype(jnp.bfloat16)
    w2 = jnp.pad(w2, ((0, 0), (0, Cout_p - Cout))).astype(jnp.float32)
    b1 = jnp.pad(b1, (0, Cout_p - Cout)).reshape(1, Cout_p).astype(jnp.float32)
    b2 = jnp.pad(b2, (0, Cout_p - Cout)).reshape(1, Cout_p).astype(jnp.float32)

    # Layout: NCHW -> NHWC (channels on the 128-lane axis), bf16 MXU operand.
    # TODO(synk): drop these transposes when the surrounding network is NHWC.
    x = jnp.transpose(x_nchw, (0, 2, 3, 1))
    if Cin_p != Cin:
        x = jnp.pad(x, ((0, 0), (0, 0), (0, 0), (0, Cin_p - Cin)))
    x = x.astype(jnp.bfloat16)

    # Scratch width: data at cols [0, W), zero pad at [W, Wbuf) (>= 2*pad wide).
    Wbuf = _round_up(W + 2 * pad, 8)

    # Tile height: largest divisor of H fitting a conservative VMEM budget
    # (48 MiB leaves headroom on v7x's 64 MiB; v5e/v6e have 128 MiB).
    BUDGET = 48 * 1024 * 1024
    TH = _pick_tile_h(H, W, Wbuf, Cin_p, Cout_p, K, pad, BUDGET)
    nH = H // TH
    G = _pick_group(TH, W, Wbuf, Cout_p)

    est = _vmem_estimate(H, W, TH, Wbuf, Cin_p, Cout_p, K, pad)
    vmem_limit = int(min(max(32 * 1024 * 1024, 1.5 * est), 56 * 1024 * 1024))

    kern = functools.partial(_fused_kernel, TH=TH, W=W, Wbuf=Wbuf, K=K,
                             pad=pad, G=G)
    out = pl.pallas_call(
        kern,
        out_shape=jax.ShapeDtypeStruct((N, H, W, Cout_p), jnp.float32),
        grid=(N, nH),                     # h innermost -> x slab resident per n
        in_specs=[
            pl.BlockSpec((1, H, W, Cin_p), lambda n, h: (n, 0, 0, 0)),
            pl.BlockSpec((Cin_p, Cout_p), lambda n, h: (0, 0)),
            pl.BlockSpec((1, Cout_p), lambda n, h: (0, 0)),
            pl.BlockSpec((K * K, Cout_p), lambda n, h: (0, 0)),
            pl.BlockSpec((1, Cout_p), lambda n, h: (0, 0)),
        ],
        out_specs=pl.BlockSpec((1, TH, W, Cout_p), lambda n, h: (n, h, 0, 0)),
        scratch_shapes=[
            pltpu.VMEM((TH + 2 * pad, Wbuf, Cout_p), jnp.float32)],
        compiler_params=pltpu.CompilerParams(
            dimension_semantics=("parallel", "parallel"),
            vmem_limit_bytes=vmem_limit),
    )(x, w1, b1, w2, b2)

    out = out[..., :Cout]                      # drop channel padding
    # use_lab=False -> LearnableAffineBlock is Identity
    # TODO(synk): if use_lab=True, fold the scalar LAB affine into b2/w2 above.
    return jnp.transpose(out, (0, 3, 1, 2))    # back to NCHW


# ----------------------------------------------------------------------------
# Pure-JAX reference (same math, via lax.conv) for a sanity check
# ----------------------------------------------------------------------------
def reference(x_nchw, params, K):
    Cout = params["bn1_gamma"].shape[0]
    w1 = jnp.transpose(params["w1_ic_oc"], (1, 0))[:, :, None, None]  # OIHW
    y = lax.conv_general_dilated(x_nchw, w1, (1, 1), "VALID",
                                 dimension_numbers=("NCHW", "OIHW", "NCHW"))
    s1, b1 = bn_fold(params["bn1_gamma"], params["bn1_beta"],
                     params["bn1_mean"], params["bn1_var"])
    y = y * s1[None, :, None, None] + b1[None, :, None, None]

    w2 = jnp.transpose(params["w2_kkc"], (2, 0, 1))[:, None, :, :]    # (Cout,1,K,K)
    pad = (K - 1) // 2
    y = lax.conv_general_dilated(y, w2, (1, 1), [(pad, pad), (pad, pad)],
                                 feature_group_count=Cout,
                                 dimension_numbers=("NCHW", "OIHW", "NCHW"))
    s2, b2 = bn_fold(params["bn2_gamma"], params["bn2_beta"],
                     params["bn2_mean"], params["bn2_var"])
    y = y * s2[None, :, None, None] + b2[None, :, None, None]
    return jnp.maximum(y, 0.0)


if __name__ == "__main__":
    N, Cin, H, W = 2, 4, 16, 16
    Cout, K = 8, 3

    key = jax.random.PRNGKey(0)
    ks = jax.random.split(key, 9)
    params = {
        # conv1: 1x1, weights stored as (Cin, Cout) for the matmul kernel
        "w1_ic_oc": jax.random.normal(ks[0], (Cin, Cout), jnp.float32) * 0.1,
        "bn1_gamma": jax.random.normal(ks[1], (Cout,), jnp.float32) * 0.1 + 1.0,
        "bn1_beta": jax.random.normal(ks[2], (Cout,), jnp.float32) * 0.1,
        "bn1_mean": jax.random.normal(ks[3], (Cout,), jnp.float32) * 0.1,
        "bn1_var": jnp.abs(jax.random.normal(ks[4], (Cout,), jnp.float32)) * 0.1 + 1.0,
        # conv2: depthwise KxK, stored as (K, K, Cout)
        "w2_kkc": jax.random.normal(ks[5], (K, K, Cout), jnp.float32) * 0.1,
        "bn2_gamma": jax.random.normal(ks[6], (Cout,), jnp.float32) * 0.1 + 1.0,
        "bn2_beta": jax.random.normal(ks[7], (Cout,), jnp.float32) * 0.1,
        "bn2_mean": jnp.zeros((Cout,), jnp.float32),
        "bn2_var": jnp.ones((Cout,), jnp.float32),
    }

    x = jax.random.normal(ks[8], (N, Cin, H, W), jnp.float32)

    out = light_conv_bn_act(x, params, K)
    out = jax.block_until_ready(out)

    ref = jax.block_until_ready(reference(x, params, K))
    assert out.shape == (N, Cout, H, W), out.shape
    # bf16 MXU operands -> compare against the f32 reference at bf16 tolerance.
    err = float(jnp.max(jnp.abs(out - ref)))
    assert jnp.allclose(out, ref, atol=3e-2, rtol=3e-2), err

    print("KERNEL_OK")
</pallas_src>

<mosaic_0001>
module attributes {stable_mosaic.version = 11 : i64} {
  func.func @_fused_kernel(%arg0: i32, %arg1: i32, %arg2: memref<1x16x16x128xbf16, #tpu.memory_space<vmem>>, %arg3: memref<128x128xbf16, #tpu.memory_space<vmem>>, %arg4: memref<1x128xf32, #tpu.memory_space<vmem>>, %arg5: memref<9x128xf32, #tpu.memory_space<vmem>>, %arg6: memref<1x128xf32, #tpu.memory_space<vmem>>, %arg7: memref<1x16x16x128xf32, #tpu.memory_space<vmem>>, %arg8: memref<18x24x128xf32, #tpu.memory_space<vmem>>) attributes {dimension_semantics = [#tpu.dimension_semantics<parallel>, #tpu.dimension_semantics<parallel>], iteration_bounds = array<i64: 2, 1>, scalar_prefetch = 0 : i64, scratch_operands = 1 : i64, tpu.core_type = #tpu.core_type<tc>, window_params = [{transform_indices = @transform_0, window_bounds = array<i64: 1, 16, 16, 128>}, {pipeline_mode = #tpu.pipeline_mode<synchronous>, transform_indices = @transform_1, window_bounds = array<i64: 128, 128>}, {pipeline_mode = #tpu.pipeline_mode<synchronous>, transform_indices = @transform_2, window_bounds = array<i64: 1, 128>}, {pipeline_mode = #tpu.pipeline_mode<synchronous>, transform_indices = @transform_3, window_bounds = array<i64: 9, 128>}, {pipeline_mode = #tpu.pipeline_mode<synchronous>, transform_indices = @transform_4, window_bounds = array<i64: 1, 128>}, {transform_indices = @transform_5, window_bounds = array<i64: 1, 16, 16, 128>}]} {
    %cst = arith.constant 0.000000e+00 : f32
    %0 = vector.broadcast %cst : f32 to vector<18x8x128xf32>
    %c0 = arith.constant 0 : index
    %c16 = arith.constant 16 : index
    %c0_0 = arith.constant 0 : index
    %1 = vector.load %arg8[%c0, %c16, %c0_0] : memref<18x24x128xf32, #tpu.memory_space<vmem>>, vector<18x8x128xf32>
    tpu.vector_store %arg8[%c0, %c16, %c0_0], %0 {strides = array<i32>} : memref<18x24x128xf32, #tpu.memory_space<vmem>>, vector<18x8x128xf32>,
    %c0_i32 = arith.constant 0 : i32
    %2 = arith.cmpi eq, %arg1, %c0_i32 : i32
    %3 = arith.extui %2 : i1 to i32
    %c0_i32_1 = arith.constant 0 : i32
    %4 = arith.cmpi ne, %3, %c0_i32_1 : i32
    scf.if %4 {
      %cst_90 = arith.constant 0.000000e+00 : f32
      %282 = vector.broadcast %cst_90 : f32 to vector<1x16x128xf32>
      %c0_91 = arith.constant 0 : index
      %c0_92 = arith.constant 0 : index
      %c0_93 = arith.constant 0 : index
      %283 = vector.load %arg8[%c0_91, %c0_92, %c0_93] : memref<18x24x128xf32, #tpu.memory_space<vmem>>, vector<1x16x128xf32>
      tpu.vector_store %arg8[%c0_91, %c0_92, %c0_93], %282 {strides = array<i32>} : memref<18x24x128xf32, #tpu.memory_space<vmem>>, vector<1x16x128xf32>,
    } else {
    }
    %c0_i32_2 = arith.constant 0 : i32
    %5 = arith.cmpi eq, %arg1, %c0_i32_2 : i32
    %6 = arith.extui %5 : i1 to i32
    %c0_i32_3 = arith.constant 0 : i32
    %7 = arith.cmpi ne, %6, %c0_i32_3 : i32
    scf.if %7 {
      %cst_90 = arith.constant 0.000000e+00 : f32
      %282 = vector.broadcast %cst_90 : f32 to vector<1x16x128xf32>
      %c17 = arith.constant 17 : index
      %c0_91 = arith.constant 0 : index
      %c0_92 = arith.constant 0 : index
      %283 = vector.load %arg8[%c17, %c0_91, %c0_92] : memref<18x24x128xf32, #tpu.memory_space<vmem>>, vector<1x16x128xf32>
      tpu.vector_store %arg8[%c17, %c0_91, %c0_92], %282 {strides = array<i32>} : memref<18x24x128xf32, #tpu.memory_space<vmem>>, vector<1x16x128xf32>,
    } else {
    }
    %c0_4 = arith.constant 0 : index
    %c0_5 = arith.constant 0 : index
    %8 = vector.load %arg3[%c0_4, %c0_5] : memref<128x128xbf16, #tpu.memory_space<vmem>>, vector<128x128xbf16>
    %c0_6 = arith.constant 0 : index
    %c0_7 = arith.constant 0 : index
    %9 = vector.load %arg4[%c0_6, %c0_7] : memref<1x128xf32, #tpu.memory_space<vmem>>, vector<1x128xf32>
    %c16_i32 = arith.constant 16 : i32
    %10 = arith.muli %arg1, %c16_i32 : i32
    %11 = tpu.assume_multiple %10, 8 : i32
    %c0_8 = arith.constant 0 : index
    %12 = arith.index_cast %11 : i32 to index
    %c0_9 = arith.constant 0 : index
    %c0_10 = arith.constant 0 : index
    %13 = vector.load %arg2[%c0_8, %12, %c0_9, %c0_10] : memref<1x16x16x128xbf16, #tpu.memory_space<vmem>>, vector<1x16x16x128xbf16>
    %14 = vector.shape_cast %13 : vector<1x16x16x128xbf16> to vector<16x16x128xbf16>
    %15 = vector.shape_cast %14 : vector<16x16x128xbf16> to vector<256x128xbf16>
    %cst_11 = arith.constant dense<0.000000e+00> : vector<256x128xf32>
    %16 = tpu.matmul %15, %8, %cst_11 {dimension_numbers = #tpu.dot_dimension_numbers<[1], [0], [0], [1], [0, 0, 1, 1], [], []>} : vector<256x128xbf16>, vector<128x128xbf16>, vector<256x128xf32> -> vector<256x128xf32>
    %17 = vector.broadcast %9 : vector<1x128xf32> to vector<256x128xf32>
    %18 = arith.addf %16, %17 : vector<256x128xf32>
    %19 = vector.shape_cast %18 : vector<256x128xf32> to vector<16x16x128xf32>
    %c1 = arith.constant 1 : index
    %c0_12 = arith.constant 0 : index
    %c0_13 = arith.constant 0 : index
    %20 = vector.load %arg8[%c1, %c0_12, %c0_13] : memref<18x24x128xf32, #tpu.memory_space<vmem>>, vector<16x16x128xf32>
    tpu.vector_store %arg8[%c1, %c0_12, %c0_13], %19 {strides = array<i32>} : memref<18x24x128xf32, #tpu.memory_space<vmem>>, vector<16x16x128xf32>,
    %c0_i32_14 = arith.constant 0 : i32
    %21 = arith.cmpi sgt, %arg1, %c0_i32_14 : i32
    %22 = arith.extui %21 : i1 to i32
    %c0_i32_15 = arith.constant 0 : i32
    %23 = arith.cmpi ne, %22, %c0_i32_15 : i32
    scf.if %23 {
      %c16_i32_90 = arith.constant 16 : i32
      %282 = arith.muli %arg1, %c16_i32_90 : i32
      %c1_i32_91 = arith.constant 1 : i32
      %283 = arith.subi %282, %c1_i32_91 : i32
      %c0_92 = arith.constant 0 : index
      %284 = arith.index_cast %283 : i32 to index
      %c0_93 = arith.constant 0 : index
      %c0_94 = arith.constant 0 : index
      %285 = vector.load %arg2[%c0_92, %284, %c0_93, %c0_94] : memref<1x16x16x128xbf16, #tpu.memory_space<vmem>>, vector<1x1x16x128xbf16>
      %286 = vector.shape_cast %285 : vector<1x1x16x128xbf16> to vector<1x16x128xbf16>
      %287 = vector.shape_cast %286 : vector<1x16x128xbf16> to vector<16x128xbf16>
      %cst_95 = arith.constant dense<0.000000e+00> : vector<16x128xf32>
      %288 = tpu.matmul %287, %8, %cst_95 {dimension_numbers = #tpu.dot_dimension_numbers<[1], [0], [0], [1], [0, 0, 1, 1], [], []>} : vector<16x128xbf16>, vector<128x128xbf16>, vector<16x128xf32> -> vector<16x128xf32>
      %289 = vector.broadcast %9 : vector<1x128xf32> to vector<16x128xf32>
      %290 = arith.addf %288, %289 : vector<16x128xf32>
      %291 = vector.shape_cast %290 : vector<16x128xf32> to vector<1x16x128xf32>
      %c0_96 = arith.constant 0 : index
      %c0_97 = arith.constant 0 : index
      %c0_98 = arith.constant 0 : index
      %292 = vector.load %arg8[%c0_96, %c0_97, %c0_98] : memref<18x24x128xf32, #tpu.memory_space<vmem>>, vector<1x16x128xf32>
      tpu.vector_store %arg8[%c0_96, %c0_97, %c0_98], %291 {strides = array<i32>} : memref<18x24x128xf32, #tpu.memory_space<vmem>>, vector<1x16x128xf32>,
    } else {
    }
    %c0_i32_16 = arith.constant 0 : i32
    %24 = arith.cmpi slt, %arg1, %c0_i32_16 : i32
    %25 = arith.extui %24 : i1 to i32
    %c0_i32_17 = arith.constant 0 : i32
    %26 = arith.cmpi ne, %25, %c0_i32_17 : i32
    scf.if %26 {
      %c16_i32_90 = arith.constant 16 : i32
      %282 = arith.muli %arg1, %c16_i32_90 : i32
      %c16_i32_91 = arith.constant 16 : i32
      %283 = arith.addi %282, %c16_i32_91 : i32
      %c0_92 = arith.constant 0 : index
      %284 = arith.index_cast %283 : i32 to index
      %c0_93 = arith.constant 0 : index
      %c0_94 = arith.constant 0 : index
      %285 = vector.load %arg2[%c0_92, %284, %c0_93, %c0_94] : memref<1x16x16x128xbf16, #tpu.memory_space<vmem>>, vector<1x1x16x128xbf16>
      %286 = vector.shape_cast %285 : vector<1x1x16x128xbf16> to vector<1x16x128xbf16>
      %287 = vector.shape_cast %286 : vector<1x16x128xbf16> to vector<16x128xbf16>
      %cst_95 = arith.constant dense<0.000000e+00> : vector<16x128xf32>
      %288 = tpu.matmul %287, %8, %cst_95 {dimension_numbers = #tpu.dot_dimension_numbers<[1], [0], [0], [1], [0, 0, 1, 1], [], []>} : vector<16x128xbf16>, vector<128x128xbf16>, vector<16x128xf32> -> vector<16x128xf32>
      %289 = vector.broadcast %9 : vector<1x128xf32> to vector<16x128xf32>
      %290 = arith.addf %288, %289 : vector<16x128xf32>
      %291 = vector.shape_cast %290 : vector<16x128xf32> to vector<1x16x128xf32>
      %c17 = arith.constant 17 : index
      %c0_96 = arith.constant 0 : index
      %c0_97 = arith.constant 0 : index
      %292 = vector.load %arg8[%c17, %c0_96, %c0_97] : memref<18x24x128xf32, #tpu.memory_space<vmem>>, vector<1x16x128xf32>
      tpu.vector_store %arg8[%c17, %c0_96, %c0_97], %291 {strides = array<i32>} : memref<18x24x128xf32, #tpu.memory_space<vmem>>, vector<1x16x128xf32>,
    } else {
    }
    %c0_18 = arith.constant 0 : index
    %c0_19 = arith.constant 0 : index
    %27 = vector.load %arg5[%c0_18, %c0_19] : memref<9x128xf32, #tpu.memory_space<vmem>>, vector<9x128xf32>
    %c0_20 = arith.constant 0 : index
    %c0_21 = arith.constant 0 : index
    %28 = vector.load %arg6[%c0_20, %c0_21] : memref<1x128xf32, #tpu.memory_space<vmem>>, vector<1x128xf32>
    %29 = vector.extract_strided_slice %27 {offsets = [0, 0], sizes = [1, 128], strides = [1, 1]} : vector<9x128xf32> to vector<1x128xf32>
    %30 = vector.extract_strided_slice %27 {offsets = [1, 0], sizes = [1, 128], strides = [1, 1]} : vector<9x128xf32> to vector<1x128xf32>
    %31 = vector.extract_strided_slice %27 {offsets = [2, 0], sizes = [1, 128], strides = [1, 1]} : vector<9x128xf32> to vector<1x128xf32>
    %32 = vector.extract_strided_slice %27 {offsets = [3, 0], sizes = [1, 128], strides = [1, 1]} : vector<9x128xf32> to vector<1x128xf32>
    %33 = vector.extract_strided_slice %27 {offsets = [4, 0], sizes = [1, 128], strides = [1, 1]} : vector<9x128xf32> to vector<1x128xf32>
    %34 = vector.extract_strided_slice %27 {offsets = [5, 0], sizes = [1, 128], strides = [1, 1]} : vector<9x128xf32> to vector<1x128xf32>
    %35 = vector.extract_strided_slice %27 {offsets = [6, 0], sizes = [1, 128], strides = [1, 1]} : vector<9x128xf32> to vector<1x128xf32>
    %36 = vector.extract_strided_slice %27 {offsets = [7, 0], sizes = [1, 128], strides = [1, 1]} : vector<9x128xf32> to vector<1x128xf32>
    %37 = vector.extract_strided_slice %27 {offsets = [8, 0], sizes = [1, 128], strides = [1, 1]} : vector<9x128xf32> to vector<1x128xf32>
    %c0_22 = arith.constant 0 : index
    %c0_23 = arith.constant 0 : index
    %c0_24 = arith.constant 0 : index
    %38 = vector.load %arg8[%c0_22, %c0_23, %c0_24] : memref<18x24x128xf32, #tpu.memory_space<vmem>>, vector<4x24x128xf32>
    %c1_i32 = arith.constant 1 : i32
    %39 = tpu.dynamic_rotate %38 by %c1_i32 dim 1 : vector<4x24x128xf32>, i32 -> vector<4x24x128xf32>
    %40 = vector.extract_strided_slice %39 {offsets = [0, 0, 0], sizes = [4, 16, 128], strides = [1, 1, 1]} : vector<4x24x128xf32> to vector<4x16x128xf32>
    %41 = vector.shape_cast %29 : vector<1x128xf32> to vector<1x1x128xf32>
    %42 = vector.broadcast %41 : vector<1x1x128xf32> to vector<4x16x128xf32>
    %43 = arith.mulf %40, %42 : vector<4x16x128xf32>
    %44 = vector.extract_strided_slice %38 {offsets = [0, 0, 0], sizes = [4, 16, 128], strides = [1, 1, 1]} : vector<4x24x128xf32> to vector<4x16x128xf32>
    %45 = vector.shape_cast %30 : vector<1x128xf32> to vector<1x1x128xf32>
    %46 = vector.broadcast %45 : vector<1x1x128xf32> to vector<4x16x128xf32>
    %47 = arith.mulf %44, %46 : vector<4x16x128xf32>
    %48 = arith.addf %43, %47 : vector<4x16x128xf32>
    %c23_i32 = arith.constant 23 : i32
    %49 = tpu.dynamic_rotate %38 by %c23_i32 dim 1 : vector<4x24x128xf32>, i32 -> vector<4x24x128xf32>
    %50 = vector.extract_strided_slice %49 {offsets = [0, 0, 0], sizes = [4, 16, 128], strides = [1, 1, 1]} : vector<4x24x128xf32> to vector<4x16x128xf32>
    %51 = vector.shape_cast %31 : vector<1x128xf32> to vector<1x1x128xf32>
    %52 = vector.broadcast %51 : vector<1x1x128xf32> to vector<4x16x128xf32>
    %53 = arith.mulf %50, %52 : vector<4x16x128xf32>
    %54 = arith.addf %48, %53 : vector<4x16x128xf32>
    %c1_25 = arith.constant 1 : index
    %c0_26 = arith.constant 0 : index
    %c0_27 = arith.constant 0 : index
    %55 = vector.load %arg8[%c1_25, %c0_26, %c0_27] : memref<18x24x128xf32, #tpu.memory_space<vmem>>, vector<4x24x128xf32>
    %c1_i32_28 = arith.constant 1 : i32
    %56 = tpu.dynamic_rotate %55 by %c1_i32_28 dim 1 : vector<4x24x128xf32>, i32 -> vector<4x24x128xf32>
    %57 = vector.extract_strided_slice %56 {offsets = [0, 0, 0], sizes = [4, 16, 128], strides = [1, 1, 1]} : vector<4x24x128xf32> to vector<4x16x128xf32>
    %58 = vector.shape_cast %32 : vector<1x128xf32> to vector<1x1x128xf32>
    %59 = vector.broadcast %58 : vector<1x1x128xf32> to vector<4x16x128xf32>
    %60 = arith.mulf %57, %59 : vector<4x16x128xf32>
    %61 = arith.addf %54, %60 : vector<4x16x128xf32>
    %62 = vector.extract_strided_slice %55 {offsets = [0, 0, 0], sizes = [4, 16, 128], strides = [1, 1, 1]} : vector<4x24x128xf32> to vector<4x16x128xf32>
    %63 = vector.shape_cast %33 : vector<1x128xf32> to vector<1x1x128xf32>
    %64 = vector.broadcast %63 : vector<1x1x128xf32> to vector<4x16x128xf32>
    %65 = arith.mulf %62, %64 : vector<4x16x128xf32>
    %66 = arith.addf %61, %65 : vector<4x16x128xf32>
    %c23_i32_29 = arith.constant 23 : i32
    %67 = tpu.dynamic_rotate %55 by %c23_i32_29 dim 1 : vector<4x24x128xf32>, i32 -> vector<4x24x128xf32>
    %68 = vector.extract_strided_slice %67 {offsets = [0, 0, 0], sizes = [4, 16, 128], strides = [1, 1, 1]} : vector<4x24x128xf32> to vector<4x16x128xf32>
    %69 = vector.shape_cast %34 : vector<1x128xf32> to vector<1x1x128xf32>
    %70 = vector.broadcast %69 : vector<1x1x128xf32> to vector<4x16x128xf32>
    %71 = arith.mulf %68, %70 : vector<4x16x128xf32>
    %72 = arith.addf %66, %71 : vector<4x16x128xf32>
    %c2 = arith.constant 2 : index
    %c0_30 = arith.constant 0 : index
    %c0_31 = arith.constant 0 : index
    %73 = vector.load %arg8[%c2, %c0_30, %c0_31] : memref<18x24x128xf32, #tpu.memory_space<vmem>>, vector<4x24x128xf32>
    %c1_i32_32 = arith.constant 1 : i32
    %74 = tpu.dynamic_rotate %73 by %c1_i32_32 dim 1 : vector<4x24x128xf32>, i32 -> vector<4x24x128xf32>
    %75 = vector.extract_strided_slice %74 {offsets = [0, 0, 0], sizes = [4, 16, 128], strides = [1, 1, 1]} : vector<4x24x128xf32> to vector<4x16x128xf32>
    %76 = vector.shape_cast %35 : vector<1x128xf32> to vector<1x1x128xf32>
    %77 = vector.broadcast %76 : vector<1x1x128xf32> to vector<4x16x128xf32>
    %78 = arith.mulf %75, %77 : vector<4x16x128xf32>
    %79 = arith.addf %72, %78 : vector<4x16x128xf32>
    %80 = vector.extract_strided_slice %73 {offsets = [0, 0, 0], sizes = [4, 16, 128], strides = [1, 1, 1]} : vector<4x24x128xf32> to vector<4x16x128xf32>
    %81 = vector.shape_cast %36 : vector<1x128xf32> to vector<1x1x128xf32>
    %82 = vector.broadcast %81 : vector<1x1x128xf32> to vector<4x16x128xf32>
    %83 = arith.mulf %80, %82 : vector<4x16x128xf32>
    %84 = arith.addf %79, %83 : vector<4x16x128xf32>
    %c23_i32_33 = arith.constant 23 : i32
    %85 = tpu.dynamic_rotate %73 by %c23_i32_33 dim 1 : vector<4x24x128xf32>, i32 -> vector<4x24x128xf32>
    %86 = vector.extract_strided_slice %85 {offsets = [0, 0, 0], sizes = [4, 16, 128], strides = [1, 1, 1]} : vector<4x24x128xf32> to vector<4x16x128xf32>
    %87 = vector.shape_cast %37 : vector<1x128xf32> to vector<1x1x128xf32>
    %88 = vector.broadcast %87 : vector<1x1x128xf32> to vector<4x16x128xf32>
    %89 = arith.mulf %86, %88 : vector<4x16x128xf32>
    %90 = arith.addf %84, %89 : vector<4x16x128xf32>
    %91 = vector.shape_cast %28 : vector<1x128xf32> to vector<1x1x128xf32>
    %92 = vector.broadcast %91 : vector<1x1x128xf32> to vector<4x16x128xf32>
    %93 = arith.addf %90, %92 : vector<4x16x128xf32>
    %cst_34 = arith.constant 0.000000e+00 : f32
    %94 = vector.broadcast %cst_34 : f32 to vector<4x16x128xf32>
    %95 = arith.maximumf %93, %94 : vector<4x16x128xf32>
    %c0_35 = arith.constant 0 : index
    %c0_36 = arith.constant 0 : index
    %c0_37 = arith.constant 0 : index
    %c0_38 = arith.constant 0 : index
    %96 = vector.load %arg7[%c0_35, %c0_36, %c0_37, %c0_38] : memref<1x16x16x128xf32, #tpu.memory_space<vmem>>, vector<1x4x16x128xf32>
    %97 = vector.shape_cast %96 : vector<1x4x16x128xf32> to vector<4x16x128xf32>
    %98 = vector.shape_cast %95 : vector<4x16x128xf32> to vector<1x4x16x128xf32>
    tpu.vector_store %arg7[%c0_35, %c0_36, %c0_37, %c0_38], %98 {strides = array<i32>} : memref<1x16x16x128xf32, #tpu.memory_space<vmem>>, vector<1x4x16x128xf32>,
    %c4 = arith.constant 4 : index
    %c0_39 = arith.constant 0 : index
    %c0_40 = arith.constant 0 : index
    %99 = vector.load %arg8[%c4, %c0_39, %c0_40] : memref<18x24x128xf32, #tpu.memory_space<vmem>>, vector<4x24x128xf32>
    %c1_i32_41 = arith.constant 1 : i32
    %100 = tpu.dynamic_rotate %99 by %c1_i32_41 dim 1 : vector<4x24x128xf32>, i32 -> vector<4x24x128xf32>
    %101 = vector.extract_strided_slice %100 {offsets = [0, 0, 0], sizes = [4, 16, 128], strides = [1, 1, 1]} : vector<4x24x128xf32> to vector<4x16x128xf32>
    %102 = vector.shape_cast %29 : vector<1x128xf32> to vector<1x1x128xf32>
    %103 = vector.broadcast %102 : vector<1x1x128xf32> to vector<4x16x128xf32>
    %104 = arith.mulf %101, %103 : vector<4x16x128xf32>
    %105 = vector.extract_strided_slice %99 {offsets = [0, 0, 0], sizes = [4, 16, 128], strides = [1, 1, 1]} : vector<4x24x128xf32> to vector<4x16x128xf32>
    %106 = vector.shape_cast %30 : vector<1x128xf32> to vector<1x1x128xf32>
    %107 = vector.broadcast %106 : vector<1x1x128xf32> to vector<4x16x128xf32>
    %108 = arith.mulf %105, %107 : vector<4x16x128xf32>
    %109 = arith.addf %104, %108 : vector<4x16x128xf32>
    %c23_i32_42 = arith.constant 23 : i32
    %110 = tpu.dynamic_rotate %99 by %c23_i32_42 dim 1 : vector<4x24x128xf32>, i32 -> vector<4x24x128xf32>
    %111 = vector.extract_strided_slice %110 {offsets = [0, 0, 0], sizes = [4, 16, 128], strides = [1, 1, 1]} : vector<4x24x128xf32> to vector<4x16x128xf32>
    %112 = vector.shape_cast %31 : vector<1x128xf32> to vector<1x1x128xf32>
    %113 = vector.broadcast %112 : vector<1x1x128xf32> to vector<4x16x128xf32>
    %114 = arith.mulf %111, %113 : vector<4x16x128xf32>
    %115 = arith.addf %109, %114 : vector<4x16x128xf32>
    %c5 = arith.constant 5 : index
    %c0_43 = arith.constant 0 : index
    %c0_44 = arith.constant 0 : index
    %116 = vector.load %arg8[%c5, %c0_43, %c0_44] : memref<18x24x128xf32, #tpu.memory_space<vmem>>, vector<4x24x128xf32>
    %c1_i32_45 = arith.constant 1 : i32
    %117 = tpu.dynamic_rotate %116 by %c1_i32_45 dim 1 : vector<4x24x128xf32>, i32 -> vector<4x24x128xf32>
    %118 = vector.extract_strided_slice %117 {offsets = [0, 0, 0], sizes = [4, 16, 128], strides = [1, 1, 1]} : vector<4x24x128xf32> to vector<4x16x128xf32>
    %119 = vector.shape_cast %32 : vector<1x128xf32> to vector<1x1x128xf32>
    %120 = vector.broadcast %119 : vector<1x1x128xf32> to vector<4x16x128xf32>
    %121 = arith.mulf %118, %120 : vector<4x16x128xf32>
    %122 = arith.addf %115, %121 : vector<4x16x128xf32>
    %123 = vector.extract_strided_slice %116 {offsets = [0, 0, 0], sizes = [4, 16, 128], strides = [1, 1, 1]} : vector<4x24x128xf32> to vector<4x16x128xf32>
    %124 = vector.shape_cast %33 : vector<1x128xf32> to vector<1x1x128xf32>
    %125 = vector.broadcast %124 : vector<1x1x128xf32> to vector<4x16x128xf32>
    %126 = arith.mulf %123, %125 : vector<4x16x128xf32>
    %127 = arith.addf %122, %126 : vector<4x16x128xf32>
    %c23_i32_46 = arith.constant 23 : i32
    %128 = tpu.dynamic_rotate %116 by %c23_i32_46 dim 1 : vector<4x24x128xf32>, i32 -> vector<4x24x128xf32>
    %129 = vector.extract_strided_slice %128 {offsets = [0, 0, 0], sizes = [4, 16, 128], strides = [1, 1, 1]} : vector<4x24x128xf32> to vector<4x16x128xf32>
    %130 = vector.shape_cast %34 : vector<1x128xf32> to vector<1x1x128xf32>
    %131 = vector.broadcast %130 : vector<1x1x128xf32> to vector<4x16x128xf32>
    %132 = arith.mulf %129, %131 : vector<4x16x128xf32>
    %133 = arith.addf %127, %132 : vector<4x16x128xf32>
    %c6 = arith.constant 6 : index
    %c0_47 = arith.constant 0 : index
    %c0_48 = arith.constant 0 : index
    %134 = vector.load %arg8[%c6, %c0_47, %c0_48] : memref<18x24x128xf32, #tpu.memory_space<vmem>>, vector<4x24x128xf32>
    %c1_i32_49 = arith.constant 1 : i32
    %135 = tpu.dynamic_rotate %134 by %c1_i32_49 dim 1 : vector<4x24x128xf32>, i32 -> vector<4x24x128xf32>
    %136 = vector.extract_strided_slice %135 {offsets = [0, 0, 0], sizes = [4, 16, 128], strides = [1, 1, 1]} : vector<4x24x128xf32> to vector<4x16x128xf32>
    %137 = vector.shape_cast %35 : vector<1x128xf32> to vector<1x1x128xf32>
    %138 = vector.broadcast %137 : vector<1x1x128xf32> to vector<4x16x128xf32>
    %139 = arith.mulf %136, %138 : vector<4x16x128xf32>
    %140 = arith.addf %133, %139 : vector<4x16x128xf32>
    %141 = vector.extract_strided_slice %134 {offsets = [0, 0, 0], sizes = [4, 16, 128], strides = [1, 1, 1]} : vector<4x24x128xf32> to vector<4x16x128xf32>
    %142 = vector.shape_cast %36 : vector<1x128xf32> to vector<1x1x128xf32>
    %143 = vector.broadcast %142 : vector<1x1x128xf32> to vector<4x16x128xf32>
    %144 = arith.mulf %141, %143 : vector<4x16x128xf32>
    %145 = arith.addf %140, %144 : vector<4x16x128xf32>
    %c23_i32_50 = arith.constant 23 : i32
    %146 = tpu.dynamic_rotate %134 by %c23_i32_50 dim 1 : vector<4x24x128xf32>, i32 -> vector<4x24x128xf32>
    %147 = vector.extract_strided_slice %146 {offsets = [0, 0, 0], sizes = [4, 16, 128], strides = [1, 1, 1]} : vector<4x24x128xf32> to vector<4x16x128xf32>
    %148 = vector.shape_cast %37 : vector<1x128xf32> to vector<1x1x128xf32>
    %149 = vector.broadcast %148 : vector<1x1x128xf32> to vector<4x16x128xf32>
    %150 = arith.mulf %147, %149 : vector<4x16x128xf32>
    %151 = arith.addf %145, %150 : vector<4x16x128xf32>
    %152 = vector.shape_cast %28 : vector<1x128xf32> to vector<1x1x128xf32>
    %153 = vector.broadcast %152 : vector<1x1x128xf32> to vector<4x16x128xf32>
    %154 = arith.addf %151, %153 : vector<4x16x128xf32>
    %cst_51 = arith.constant 0.000000e+00 : f32
    %155 = vector.broadcast %cst_51 : f32 to vector<4x16x128xf32>
    %156 = arith.maximumf %154, %155 : vector<4x16x128xf32>
    %c0_52 = arith.constant 0 : index
    %c4_53 = arith.constant 4 : index
    %c0_54 = arith.constant 0 : index
    %c0_55 = arith.constant 0 : index
    %157 = vector.load %arg7[%c0_52, %c4_53, %c0_54, %c0_55] : memref<1x16x16x128xf32, #tpu.memory_space<vmem>>, vector<1x4x16x128xf32>
    %158 = vector.shape_cast %157 : vector<1x4x16x128xf32> to vector<4x16x128xf32>
    %159 = vector.shape_cast %156 : vector<4x16x128xf32> to vector<1x4x16x128xf32>
    tpu.vector_store %arg7[%c0_52, %c4_53, %c0_54, %c0_55], %159 {strides = array<i32>} : memref<1x16x16x128xf32, #tpu.memory_space<vmem>>, vector<1x4x16x128xf32>,
    %c8 = arith.constant 8 : index
    %c0_56 = arith.constant 0 : index
    %c0_57 = arith.constant 0 : index
    %160 = vector.load %arg8[%c8, %c0_56, %c0_57] : memref<18x24x128xf32, #tpu.memory_space<vmem>>, vector<4x24x128xf32>
    %c1_i32_58 = arith.constant 1 : i32
    %161 = tpu.dynamic_rotate %160 by %c1_i32_58 dim 1 : vector<4x24x128xf32>, i32 -> vector<4x24x128xf32>
    %162 = vector.extract_strided_slice %161 {offsets = [0, 0, 0], sizes = [4, 16, 128], strides = [1, 1, 1]} : vector<4x24x128xf32> to vector<4x16x128xf32>
    %163 = vector.shape_cast %29 : vector<1x128xf32> to vector<1x1x128xf32>
    %164 = vector.broadcast %163 : vector<1x1x128xf32> to vector<4x16x128xf32>
    %165 = arith.mulf %162, %164 : vector<4x16x128xf32>
    %166 = vector.extract_strided_slice %160 {offsets = [0, 0, 0], sizes = [4, 16, 128], strides = [1, 1, 1]} : vector<4x24x128xf32> to vector<4x16x128xf32>
    %167 = vector.shape_cast %30 : vector<1x128xf32> to vector<1x1x128xf32>
    %168 = vector.broadcast %167 : vector<1x1x128xf32> to vector<4x16x128xf32>
    %169 = arith.mulf %166, %168 : vector<4x16x128xf32>
    %170 = arith.addf %165, %169 : vector<4x16x128xf32>
    %c23_i32_59 = arith.constant 23 : i32
    %171 = tpu.dynamic_rotate %160 by %c23_i32_59 dim 1 : vector<4x24x128xf32>, i32 -> vector<4x24x128xf32>
    %172 = vector.extract_strided_slice %171 {offsets = [0, 0, 0], sizes = [4, 16, 128], strides = [1, 1, 1]} : vector<4x24x128xf32> to vector<4x16x128xf32>
    %173 = vector.shape_cast %31 : vector<1x128xf32> to vector<1x1x128xf32>
    %174 = vector.broadcast %173 : vector<1x1x128xf32> to vector<4x16x128xf32>
    %175 = arith.mulf %172, %174 : vector<4x16x128xf32>
    %176 = arith.addf %170, %175 : vector<4x16x128xf32>
    %c9 = arith.constant 9 : index
    %c0_60 = arith.constant 0 : index
    %c0_61 = arith.constant 0 : index
    %177 = vector.load %arg8[%c9, %c0_60, %c0_61] : memref<18x24x128xf32, #tpu.memory_space<vmem>>, vector<4x24x128xf32>
    %c1_i32_62 = arith.constant 1 : i32
    %178 = tpu.dynamic_rotate %177 by %c1_i32_62 dim 1 : vector<4x24x128xf32>, i32 -> vector<4x24x128xf32>
    %179 = vector.extract_strided_slice %178 {offsets = [0, 0, 0], sizes = [4, 16, 128], strides = [1, 1, 1]} : vector<4x24x128xf32> to vector<4x16x128xf32>
    %180 = vector.shape_cast %32 : vector<1x128xf32> to vector<1x1x128xf32>
    %181 = vector.broadcast %180 : vector<1x1x128xf32> to vector<4x16x128xf32>
    %182 = arith.mulf %179, %181 : vector<4x16x128xf32>
    %183 = arith.addf %176, %182 : vector<4x16x128xf32>
    %184 = vector.extract_strided_slice %177 {offsets = [0, 0, 0], sizes = [4, 16, 128], strides = [1, 1, 1]} : vector<4x24x128xf32> to vector<4x16x128xf32>
    %185 = vector.shape_cast %33 : vector<1x128xf32> to vector<1x1x128xf32>
    %186 = vector.broadcast %185 : vector<1x1x128xf32> to vector<4x16x128xf32>
    %187 = arith.mulf %184, %186 : vector<4x16x128xf32>
    %188 = arith.addf %183, %187 : vector<4x16x128xf32>
    %c23_i32_63 = arith.constant 23 : i32
    %189 = tpu.dynamic_rotate %177 by %c23_i32_63 dim 1 : vector<4x24x128xf32>, i32 -> vector<4x24x128xf32>
    %190 = vector.extract_strided_slice %189 {offsets = [0, 0, 0], sizes = [4, 16, 128], strides = [1, 1, 1]} : vector<4x24x128xf32> to vector<4x16x128xf32>
    %191 = vector.shape_cast %34 : vector<1x128xf32> to vector<1x1x128xf32>
    %192 = vector.broadcast %191 : vector<1x1x128xf32> to vector<4x16x128xf32>
    %193 = arith.mulf %190, %192 : vector<4x16x128xf32>
    %194 = arith.addf %188, %193 : vector<4x16x128xf32>
    %c10 = arith.constant 10 : index
    %c0_64 = arith.constant 0 : index
    %c0_65 = arith.constant 0 : index
    %195 = vector.load %arg8[%c10, %c0_64, %c0_65] : memref<18x24x128xf32, #tpu.memory_space<vmem>>, vector<4x24x128xf32>
    %c1_i32_66 = arith.constant 1 : i32
    %196 = tpu.dynamic_rotate %195 by %c1_i32_66 dim 1 : vector<4x24x128xf32>, i32 -> vector<4x24x128xf32>
    %197 = vector.extract_strided_slice %196 {offsets = [0, 0, 0], sizes = [4, 16, 128], strides = [1, 1, 1]} : vector<4x24x128xf32> to vector<4x16x128xf32>
    %198 = vector.shape_cast %35 : vector<1x128xf32> to vector<1x1x128xf32>
    %199 = vector.broadcast %198 : vector<1x1x128xf32> to vector<4x16x128xf32>
    %200 = arith.mulf %197, %199 : vector<4x16x128xf32>
    %201 = arith.addf %194, %200 : vector<4x16x128xf32>
    %202 = vector.extract_strided_slice %195 {offsets = [0, 0, 0], sizes = [4, 16, 128], strides = [1, 1, 1]} : vector<4x24x128xf32> to vector<4x16x128xf32>
    %203 = vector.shape_cast %36 : vector<1x128xf32> to vector<1x1x128xf32>
    %204 = vector.broadcast %203 : vector<1x1x128xf32> to vector<4x16x128xf32>
    %205 = arith.mulf %202, %204 : vector<4x16x128xf32>
    %206 = arith.addf %201, %205 : vector<4x16x128xf32>
    %c23_i32_67 = arith.constant 23 : i32
    %207 = tpu.dynamic_rotate %195 by %c23_i32_67 dim 1 : vector<4x24x128xf32>, i32 -> vector<4x24x128xf32>
    %208 = vector.extract_strided_slice %207 {offsets = [0, 0, 0], sizes = [4, 16, 128], strides = [1, 1, 1]} : vector<4x24x128xf32> to vector<4x16x128xf32>
    %209 = vector.shape_cast %37 : vector<1x128xf32> to vector<1x1x128xf32>
    %210 = vector.broadcast %209 : vector<1x1x128xf32> to vector<4x16x128xf32>
    %211 = arith.mulf %208, %210 : vector<4x16x128xf32>
    %212 = arith.addf %206, %211 : vector<4x16x128xf32>
    %213 = vector.shape_cast %28 : vector<1x128xf32> to vector<1x1x128xf32>
    %214 = vector.broadcast %213 : vector<1x1x128xf32> to vector<4x16x128xf32>
    %215 = arith.addf %212, %214 : vector<4x16x128xf32>
    %cst_68 = arith.constant 0.000000e+00 : f32
    %216 = vector.broadcast %cst_68 : f32 to vector<4x16x128xf32>
    %217 = arith.maximumf %215, %216 : vector<4x16x128xf32>
    %c0_69 = arith.constant 0 : index
    %c8_70 = arith.constant 8 : index
    %c0_71 = arith.constant 0 : index
    %c0_72 = arith.constant 0 : index
    %218 = vector.load %arg7[%c0_69, %c8_70, %c0_71, %c0_72] : memref<1x16x16x128xf32, #tpu.memory_space<vmem>>, vector<1x4x16x128xf32>
    %219 = vector.shape_cast %218 : vector<1x4x16x128xf32> to vector<4x16x128xf32>
    %220 = vector.shape_cast %217 : vector<4x16x128xf32> to vector<1x4x16x128xf32>
    tpu.vector_store %arg7[%c0_69, %c8_70, %c0_71, %c0_72], %220 {strides = array<i32>} : memref<1x16x16x128xf32, #tpu.memory_space<vmem>>, vector<1x4x16x128xf32>,
    %c12 = arith.constant 12 : index
    %c0_73 = arith.constant 0 : index
    %c0_74 = arith.constant 0 : index
    %221 = vector.load %arg8[%c12, %c0_73, %c0_74] : memref<18x24x128xf32, #tpu.memory_space<vmem>>, vector<4x24x128xf32>
    %c1_i32_75 = arith.constant 1 : i32
    %222 = tpu.dynamic_rotate %221 by %c1_i32_75 dim 1 : vector<4x24x128xf32>, i32 -> vector<4x24x128xf32>
    %223 = vector.extract_strided_slice %222 {offsets = [0, 0, 0], sizes = [4, 16, 128], strides = [1, 1, 1]} : vector<4x24x128xf32> to vector<4x16x128xf32>
    %224 = vector.shape_cast %29 : vector<1x128xf32> to vector<1x1x128xf32>
    %225 = vector.broadcast %224 : vector<1x1x128xf32> to vector<4x16x128xf32>
    %226 = arith.mulf %223, %225 : vector<4x16x128xf32>
    %227 = vector.extract_strided_slice %221 {offsets = [0, 0, 0], sizes = [4, 16, 128], strides = [1, 1, 1]} : vector<4x24x128xf32> to vector<4x16x128xf32>
    %228 = vector.shape_cast %30 : vector<1x128xf32> to vector<1x1x128xf32>
    %229 = vector.broadcast %228 : vector<1x1x128xf32> to vector<4x16x128xf32>
    %230 = arith.mulf %227, %229 : vector<4x16x128xf32>
    %231 = arith.addf %226, %230 : vector<4x16x128xf32>
    %c23_i32_76 = arith.constant 23 : i32
    %232 = tpu.dynamic_rotate %221 by %c23_i32_76 dim 1 : vector<4x24x128xf32>, i32 -> vector<4x24x128xf32>
    %233 = vector.extract_strided_slice %232 {offsets = [0, 0, 0], sizes = [4, 16, 128], strides = [1, 1, 1]} : vector<4x24x128xf32> to vector<4x16x128xf32>
    %234 = vector.shape_cast %31 : vector<1x128xf32> to vector<1x1x128xf32>
    %235 = vector.broadcast %234 : vector<1x1x128xf32> to vector<4x16x128xf32>
    %236 = arith.mulf %233, %235 : vector<4x16x128xf32>
    %237 = arith.addf %231, %236 : vector<4x16x128xf32>
    %c13 = arith.constant 13 : index
    %c0_77 = arith.constant 0 : index
    %c0_78 = arith.constant 0 : index
    %238 = vector.load %arg8[%c13, %c0_77, %c0_78] : memref<18x24x128xf32, #tpu.memory_space<vmem>>, vector<4x24x128xf32>
    %c1_i32_79 = arith.constant 1 : i32
    %239 = tpu.dynamic_rotate %238 by %c1_i32_79 dim 1 : vector<4x24x128xf32>, i32 -> vector<4x24x128xf32>
    %240 = vector.extract_strided_slice %239 {offsets = [0, 0, 0], sizes = [4, 16, 128], strides = [1, 1, 1]} : vector<4x24x128xf32> to vector<4x16x128xf32>
    %241 = vector.shape_cast %32 : vector<1x128xf32> to vector<1x1x128xf32>
    %242 = vector.broadcast %241 : vector<1x1x128xf32> to vector<4x16x128xf32>
    %243 = arith.mulf %240, %242 : vector<4x16x128xf32>
    %244 = arith.addf %237, %243 : vector<4x16x128xf32>
    %245 = vector.extract_strided_slice %238 {offsets = [0, 0, 0], sizes = [4, 16, 128], strides = [1, 1, 1]} : vector<4x24x128xf32> to vector<4x16x128xf32>
    %246 = vector.shape_cast %33 : vector<1x128xf32> to vector<1x1x128xf32>
    %247 = vector.broadcast %246 : vector<1x1x128xf32> to vector<4x16x128xf32>
    %248 = arith.mulf %245, %247 : vector<4x16x128xf32>
    %249 = arith.addf %244, %248 : vector<4x16x128xf32>
    %c23_i32_80 = arith.constant 23 : i32
    %250 = tpu.dynamic_rotate %238 by %c23_i32_80 dim 1 : vector<4x24x128xf32>, i32 -> vector<4x24x128xf32>
    %251 = vector.extract_strided_slice %250 {offsets = [0, 0, 0], sizes = [4, 16, 128], strides = [1, 1, 1]} : vector<4x24x128xf32> to vector<4x16x128xf32>
    %252 = vector.shape_cast %34 : vector<1x128xf32> to vector<1x1x128xf32>
    %253 = vector.broadcast %252 : vector<1x1x128xf32> to vector<4x16x128xf32>
    %254 = arith.mulf %251, %253 : vector<4x16x128xf32>
    %255 = arith.addf %249, %254 : vector<4x16x128xf32>
    %c14 = arith.constant 14 : index
    %c0_81 = arith.constant 0 : index
    %c0_82 = arith.constant 0 : index
    %256 = vector.load %arg8[%c14, %c0_81, %c0_82] : memref<18x24x128xf32, #tpu.memory_space<vmem>>, vector<4x24x128xf32>
    %c1_i32_83 = arith.constant 1 : i32
    %257 = tpu.dynamic_rotate %256 by %c1_i32_83 dim 1 : vector<4x24x128xf32>, i32 -> vector<4x24x128xf32>
    %258 = vector.extract_strided_slice %257 {offsets = [0, 0, 0], sizes = [4, 16, 128], strides = [1, 1, 1]} : vector<4x24x128xf32> to vector<4x16x128xf32>
    %259 = vector.shape_cast %35 : vector<1x128xf32> to vector<1x1x128xf32>
    %260 = vector.broadcast %259 : vector<1x1x128xf32> to vector<4x16x128xf32>
    %261 = arith.mulf %258, %260 : vector<4x16x128xf32>
    %262 = arith.addf %255, %261 : vector<4x16x128xf32>
    %263 = vector.extract_strided_slice %256 {offsets = [0, 0, 0], sizes = [4, 16, 128], strides = [1, 1, 1]} : vector<4x24x128xf32> to vector<4x16x128xf32>
    %264 = vector.shape_cast %36 : vector<1x128xf32> to vector<1x1x128xf32>
    %265 = vector.broadcast %264 : vector<1x1x128xf32> to vector<4x16x128xf32>
    %266 = arith.mulf %263, %265 : vector<4x16x128xf32>
    %267 = arith.addf %262, %266 : vector<4x16x128xf32>
    %c23_i32_84 = arith.constant 23 : i32
    %268 = tpu.dynamic_rotate %256 by %c23_i32_84 dim 1 : vector<4x24x128xf32>, i32 -> vector<4x24x128xf32>
    %269 = vector.extract_strided_slice %268 {offsets = [0, 0, 0], sizes = [4, 16, 128], strides = [1, 1, 1]} : vector<4x24x128xf32> to vector<4x16x128xf32>
    %270 = vector.shape_cast %37 : vector<1x128xf32> to vector<1x1x128xf32>
    %271 = vector.broadcast %270 : vector<1x1x128xf32> to vector<4x16x128xf32>
    %272 = arith.mulf %269, %271 : vector<4x16x128xf32>
    %273 = arith.addf %267, %272 : vector<4x16x128xf32>
    %274 = vector.shape_cast %28 : vector<1x128xf32> to vector<1x1x128xf32>
    %275 = vector.broadcast %274 : vector<1x1x128xf32> to vector<4x16x128xf32>
    %276 = arith.addf %273, %275 : vector<4x16x128xf32>
    %cst_85 = arith.constant 0.000000e+00 : f32
    %277 = vector.broadcast %cst_85 : f32 to vector<4x16x128xf32>
    %278 = arith.maximumf %276, %277 : vector<4x16x128xf32>
    %c0_86 = arith.constant 0 : index
    %c12_87 = arith.constant 12 : index
    %c0_88 = arith.constant 0 : index
    %c0_89 = arith.constant 0 : index
    %279 = vector.load %arg7[%c0_86, %c12_87, %c0_88, %c0_89] : memref<1x16x16x128xf32, #tpu.memory_space<vmem>>, vector<1x4x16x128xf32>
    %280 = vector.shape_cast %279 : vector<1x4x16x128xf32> to vector<4x16x128xf32>
    %281 = vector.shape_cast %278 : vector<4x16x128xf32> to vector<1x4x16x128xf32>
    tpu.vector_store %arg7[%c0_86, %c12_87, %c0_88, %c0_89], %281 {strides = array<i32>} : memref<1x16x16x128xf32, #tpu.memory_space<vmem>>, vector<1x4x16x128xf32>,
    return
  }
  func.func @transform_0(%arg0: i32, %arg1: i32) -> (i32, i32, i32, i32) {
    %c0_i32 = arith.constant 0 : i32
    %c0_i32_0 = arith.constant 0 : i32
    %c0_i32_1 = arith.constant 0 : i32
    %c0_i32_2 = arith.constant 0 : i32
    return %arg0, %c0_i32, %c0_i32_0, %c0_i32_1 : i32, i32, i32, i32
  }
  func.func @transform_1(%arg0: i32, %arg1: i32) -> (i32, i32) {
    %c0_i32 = arith.constant 0 : i32
    %c0_i32_0 = arith.constant 0 : i32
    %c0_i32_1 = arith.constant 0 : i32
    return %c0_i32, %c0_i32_0 : i32, i32
  }
  func.func @transform_2(%arg0: i32, %arg1: i32) -> (i32, i32) {
    %c0_i32 = arith.constant 0 : i32
    %c0_i32_0 = arith.constant 0 : i32
    %c0_i32_1 = arith.constant 0 : i32
    return %c0_i32, %c0_i32_0 : i32, i32
  }
  func.func @transform_3(%arg0: i32, %arg1: i32) -> (i32, i32) {
    %c0_i32 = arith.constant 0 : i32
    %c0_i32_0 = arith.constant 0 : i32
    %c0_i32_1 = arith.constant 0 : i32
    return %c0_i32, %c0_i32_0 : i32, i32
  }
  func.func @transform_4(%arg0: i32, %arg1: i32) -> (i32, i32) {
    %c0_i32 = arith.constant 0 : i32
    %c0_i32_0 = arith.constant 0 : i32
    %c0_i32_1 = arith.constant 0 : i32
    return %c0_i32, %c0_i32_0 : i32, i32
  }
  func.func @transform_5(%arg0: i32, %arg1: i32) -> (i32, i32, i32, i32) {
    %c0_i32 = arith.constant 0 : i32
    %c0_i32_0 = arith.constant 0 : i32
    %c0_i32_1 = arith.constant 0 : i32
    return %arg0, %arg1, %c0_i32, %c0_i32_0 : i32, i32, i32, i32
  }
}

</mosaic_0001>

<llo_original>
// kernel: tpu_custom_call.1
$region0: #{tpu_custom_call.1}
  #allocation0 [shape = 'u32[]', space=smem, size = 0x4, offset = 0x4, fixed_abs, tag = 'smem constant byte address 0x4 - core index']
  #allocation1 [shape = 'u32[72,128]{1,0:T(1,128)}', space=vmem, size = 0x9000, scoped, tag = 'internal scratch']
  #allocation2 [shape = 'f32[18,24,128]{2,1,0:T(8,128)}', space=vmem, size = 0x36000, scoped, tag = 'scratch operand']
  %s0 = inlined_call_operand.hbm [shape: bf16[2,16,16,128], index: 0, kind: input, shape index: {}]
  %s1 = inlined_call_operand.hbm [shape: bf16[128,128], index: 1, kind: input, shape index: {}]
  %s2 = inlined_call_operand.vmem [shape: f32[1,128], index: 2, kind: input, shape index: {}]
  %s3 = inlined_call_operand.hbm [shape: f32[9,128], index: 3, kind: input, shape index: {}]
  %s4 = inlined_call_operand.vmem [shape: f32[1,128], index: 4, kind: input, shape index: {}]
  %s5 = inlined_call_operand.hbm [shape: f32[2,16,16,128], index: 5, kind: output, shape index: {}]
  %s6 = sld [smem:[#allocation0]]
  $region77: #{tpu_custom_call.1} parent=0
    _
  %s8 = ssub.s32 1, %s6
  %s9 = scalar_select 0, %s8, %s6
  $region1: #{tpu_custom_call.1} parent=0
    #allocation3 [shape = 'u8[131072]{0}', space=vmem, size = 0x20000, scoped, tag = 'input window, operand 0']
    #allocation4 [shape = 's32[2]{0}', space=sflag, size = 0x8, scoped, tag = 'scoped memory for tpu_custom_call.1']
    #allocation5 [shape = 's32[2]{0}', space=sflag, size = 0x8, scoped, tag = 'scoped memory for tpu_custom_call.1']
    #allocation6 [shape = 'u8[32768]{0}', space=vmem, size = 0x8000, scoped, tag = 'input window, operand 1, single buffered']
    #allocation7 [shape = 's32[1]{0}', space=sflag, size = 0x4, scoped, tag = 'scoped memory for tpu_custom_call.1']
    #allocation8 [shape = 'u8[8192]{0}', space=vmem, size = 0x2000, scoped, tag = 'input window, operand 3, single buffered']
    #allocation9 [shape = 'u8[262144]{0}', space=vmem, size = 0x40000, scoped, tag = 'output window, operand 0']
    %10 = vsyncpa [#allocation4], 0
    %s11 = scalar_lea.sflag [#allocation4], 1
    %12 = vsyncpa %s11, 0
    %13 = vsyncpa [#allocation7], 0
    %14 = vsyncpa [#allocation5], 0
    %s15 = scalar_lea.sflag [#allocation5], 1
    %16 = vsyncpa %s15, 0
    loop: start=0, step=1, limit=4
    $region2: #{tpu_custom_call.1} parent=1 // loop_pre_header
      _
    $region3: #{tpu_custom_call.1} parent=1 // loop_header
      %s18 = sphi 0, %s22
      %p19 = scmp.ge.s32.totalorder %s18, 4
      %s25 = sphi 0, %s37
      %s26 = sphi 0, %s33
      %s27 = sphi 0, %s25
      %s28 = sphi 0, %s26
      %s29 = sphi 0, %s27
      %s30 = sphi 0, %s28
      %s40 = sphi 0, %s42
      %s43 = sphi 0, %s40
      %s44 = sphi 0, %s43
      %s60 = sphi 0, %s44
      %s64 = sphi 0, %s64
      %s66 = sphi 0, %s64
      %s67 = sphi 0, %s66
      %s81 = sphi 0, %s67
      %s85 = sphi 0, %s85
      %s87 = sphi 0, %s85
      %s88 = sphi 0, %s87
      %s102 = sphi 0, %s88
      %s106 = sphi 0, %s106
      %s108 = sphi 0, %s106
      %s109 = sphi 0, %s108
      %s123 = sphi 0, %s109
      %s127 = sphi 0, %s127
      %s129 = sphi 0, %s127
      %s130 = sphi 0, %s129
      %s144 = sphi 0, %s130
      %s152 = sphi 0, %s154
      %s155 = sphi 0, %s152
      %s156 = sphi 0, %s155
      %s172 = sphi 0, %s156
    $region4: #{tpu_custom_call.1} parent=1 // loop_header_branch
      %21 = sbr.rel (%p19) target = $region8
    $region5: #{tpu_custom_call.1} parent=1 // loop_body
      %s23 = ssub.s32 %s18, 1
      %s24 = ssub.s32 %s18, 2
      %s31 = sadd.s32 1, %s26
      %p32 = scmp.ge.s32.totalorder %s31, 1
      %s33 = scalar_select %p32, 0, %s31
      %s34 = sadd.s32 1, %s25
      %s35 = scalar_select %p32, %s34, %s25
      %p36 = scmp.ge.s32.totalorder %s35, 2
      %s37 = scalar_select %p36, 0, %s35
      %s38 = ssub.s32 %s25, %s37
      %p39 = scmp.eq.s32.totalorder %s38, 0
      %s41 = sadd.s32 %s40, 1
      %s42 = scalar_select %p39, %s40, %s41
      %p45 = pneg %p39
      %p46 = scmp.eq.s32.totalorder %s18, 1
      %p47 = por %p45, %p46
      %p48 = scmp.ne.s32.totalorder %s40, %s43
      %p49 = scmp.eq.s32.totalorder %s18, 0
      %p50 = por %p48, %p49
      %p51 = scmp.ne.s32.totalorder %s40, %s43
      %p52 = scmp.eq.s32.totalorder %s23, 1
      %p53 = por %p51, %p52
      %p54 = scmp.ne.s32.totalorder %s43, %s44
      %p55 = scmp.eq.s32.totalorder %s23, 0
      %p56 = por %p54, %p55
      %p57 = scmp.ne.s32.totalorder %s43, %s44
      %p58 = scmp.eq.s32.totalorder %s24, 1
      %p59 = por %p57, %p58
      %p61 = scmp.ne.s32.totalorder %s44, %s60
      %p62 = scmp.eq.s32.totalorder %s24, 0
      %p63 = por %p61, %p62
      %s65 = sadd.s32 %s64, 1
      %p68 = scmp.eq.s32.totalorder %s18, 1
      %p69 = scmp.ne.s32.totalorder %s64, %s66
      %p70 = scmp.eq.s32.totalorder %s18, 0
      %p71 = por %p69, %p70
      %p72 = scmp.ne.s32.totalorder %s64, %s66
      %p73 = scmp.eq.s32.totalorder %s23, 1
      %p74 = por %p72, %p73
      %p75 = scmp.ne.s32.totalorder %s66, %s67
      %p76 = scmp.eq.s32.totalorder %s23, 0
      %p77 = por %p75, %p76
      %p78 = scmp.ne.s32.totalorder %s66, %s67
      %p79 = scmp.eq.s32.totalorder %s24, 1
      %p80 = por %p78, %p79
      %p82 = scmp.ne.s32.totalorder %s67, %s81
      %p83 = scmp.eq.s32.totalorder %s24, 0
      %p84 = por %p82, %p83
      %s86 = sadd.s32 %s85, 1
      %p89 = scmp.eq.s32.totalorder %s18, 1
      %p90 = scmp.ne.s32.totalorder %s85, %s87
      %p91 = scmp.eq.s32.totalorder %s18, 0
      %p92 = por %p90, %p91
      %p93 = scmp.ne.s32.totalorder %s85, %s87
      %p94 = scmp.eq.s32.totalorder %s23, 1
      %p95 = por %p93, %p94
      %p96 = scmp.ne.s32.totalorder %s87, %s88
      %p97 = scmp.eq.s32.totalorder %s23, 0
      %p98 = por %p96, %p97
      %p99 = scmp.ne.s32.totalorder %s87, %s88
      %p100 = scmp.eq.s32.totalorder %s24, 1
      %p101 = por %p99, %p100
      %p103 = scmp.ne.s32.totalorder %s88, %s102
      %p104 = scmp.eq.s32.totalorder %s24, 0
      %p105 = por %p103, %p104
      %s107 = sadd.s32 %s106, 1
      %p110 = scmp.eq.s32.totalorder %s18, 1
      %p111 = scmp.ne.s32.totalorder %s106, %s108
      %p112 = scmp.eq.s32.totalorder %s18, 0
      %p113 = por %p111, %p112
      %p114 = scmp.ne.s32.totalorder %s106, %s108
      %p115 = scmp.eq.s32.totalorder %s23, 1
      %p116 = por %p114, %p115
      %p117 = scmp.ne.s32.totalorder %s108, %s109
      %p118 = scmp.eq.s32.totalorder %s23, 0
      %p119 = por %p117, %p118
      %p120 = scmp.ne.s32.totalorder %s108, %s109
      %p121 = scmp.eq.s32.totalorder %s24, 1
      %p122 = por %p120, %p121
      %p124 = scmp.ne.s32.totalorder %s109, %s123
      %p125 = scmp.eq.s32.totalorder %s24, 0
      %p126 = por %p124, %p125
      %s128 = sadd.s32 %s127, 1
      %p131 = scmp.eq.s32.totalorder %s18, 1
      %p132 = scmp.ne.s32.totalorder %s127, %s129
      %p133 = scmp.eq.s32.totalorder %s18, 0
      %p134 = por %p132, %p133
      %p135 = scmp.ne.s32.totalorder %s127, %s129
      %p136 = scmp.eq.s32.totalorder %s23, 1
      %p137 = por %p135, %p136
      %p138 = scmp.ne.s32.totalorder %s129, %s130
      %p139 = scmp.eq.s32.totalorder %s23, 0
      %p140 = por %p138, %p139
      %p141 = scmp.ne.s32.totalorder %s129, %s130
      %p142 = scmp.eq.s32.totalorder %s24, 1
      %p143 = por %p141, %p142
      %p145 = scmp.ne.s32.totalorder %s130, %s144
      %p146 = scmp.eq.s32.totalorder %s24, 0
      %p147 = por %p145, %p146
      %s148 = ssub.s32 %s25, %s37
      %s149 = ssub.s32 %s26, %s33
      %s150 = sor.u32 %s148, %s149
      %p151 = scmp.eq.s32.totalorder %s150, 0
      %s153 = sadd.s32 %s152, 1
      %s154 = scalar_select %p151, %s152, %s153
      %p157 = pneg %p151
      %p158 = scmp.eq.s32.totalorder %s18, 1
      %p159 = por %p157, %p158
      %p160 = scmp.ne.s32.totalorder %s152, %s155
      %p161 = scmp.eq.s32.totalorder %s18, 0
      %p162 = por %p160, %p161
      %p163 = scmp.ne.s32.totalorder %s152, %s155
      %p164 = scmp.eq.s32.totalorder %s23, 1
      %p165 = por %p163, %p164
      %p166 = scmp.ne.s32.totalorder %s155, %s156
      %p167 = scmp.eq.s32.totalorder %s23, 0
      %p168 = por %p166, %p167
      %p169 = scmp.ne.s32.totalorder %s155, %s156
      %p170 = scmp.eq.s32.totalorder %s24, 1
      %p171 = por %p169, %p170
      %p173 = scmp.ne.s32.totalorder %s156, %s172
      %p174 = scmp.eq.s32.totalorder %s24, 0
      %p175 = por %p173, %p174
      %p176 = scmp.le.s32.totalorder 1, %s18
      %p177 = scmp.lt.s32.totalorder %s18, 3
      %p178 = pnand %p176, %p177
      %p179 = pneg %p178
      // Predicated region
      $region9: #{tpu_custom_call.1} parent=5 // pred_check
        _
      $region10: #{tpu_custom_call.1} parent=5 // pred_check_branch
        %181 = sbr.rel (%p178) target = $region12
      $region11: #{tpu_custom_call.1} parent=5 // pred_region
        %s182 = ssub.s32 %s18, 1
        // Predicated region
        $region13: #{tpu_custom_call.1} parent=11 // pred_check
          %p183 = pneg %p77
        $region14: #{tpu_custom_call.1} parent=11 // pred_check_branch
          %185 = sbr.rel (%p183) target = $region16
        $region15: #{tpu_custom_call.1} parent=11 // pred_region
          %187 = vsyncadd [#allocation7], 0
          %s188 = sshll.u32 %s1, 4
          %s189 = int_to_ptr.hbm [resolvable:$true] %s188
          %s190 = sshll.u32 [#allocation6], 4
          %s191 = int_to_ptr.vmem [resolvable:$true] %s190
          %196 = dma.hbm_to_vmem [thread:$0]  %s189, 1024, %s191, [#allocation7], 64, 64, 4
        $region16: #{tpu_custom_call.1} parent=11 // pred_fallthru
          _
        // Predicated region
        $region17: #{tpu_custom_call.1} parent=11 // pred_check
          %p197 = pneg %p98
        $region18: #{tpu_custom_call.1} parent=11 // pred_check_branch
          %199 = sbr.rel (%p197) target = $region20
        $region19: #{tpu_custom_call.1} parent=11 // pred_region
          _
        $region20: #{tpu_custom_call.1} parent=11 // pred_fallthru
          _
        // Predicated region
        $region21: #{tpu_custom_call.1} parent=11 // pred_check
          %p200 = pneg %p119
        $region22: #{tpu_custom_call.1} parent=11 // pred_check_branch
          %202 = sbr.rel (%p200) target = $region24
        $region23: #{tpu_custom_call.1} parent=11 // pred_region
          %204 = vsyncadd [#allocation7], 0
          %s205 = sshll.u32 %s3, 4
          %s206 = int_to_ptr.hbm [resolvable:$true] %s205
          %s207 = sshll.u32 [#allocation8], 4
          %s208 = int_to_ptr.vmem [resolvable:$true] %s207
          %213 = dma.hbm_to_vmem [thread:$0]  %s206, 256, %s208, [#allocation7], 128, 128, 8
        $region24: #{tpu_custom_call.1} parent=11 // pred_fallthru
          _
        // Predicated region
        $region25: #{tpu_custom_call.1} parent=11 // pred_check
          %p214 = pneg %p140
        $region26: #{tpu_custom_call.1} parent=11 // pred_check_branch
          %216 = sbr.rel (%p214) target = $region28
        $region27: #{tpu_custom_call.1} parent=11 // pred_region
          _
        $region28: #{tpu_custom_call.1} parent=11 // pred_fallthru
          _
      $region12: #{tpu_custom_call.1} parent=5 // pred_fallthru
        _
      %p217 = scmp.lt.s32.totalorder %s18, 2
      // Predicated region
      $region29: #{tpu_custom_call.1} parent=5 // pred_check
        %p218 = pneg %p217
      $region30: #{tpu_custom_call.1} parent=5 // pred_check_branch
        %220 = sbr.rel (%p218) target = $region32
      $region31: #{tpu_custom_call.1} parent=5 // pred_region
        // Predicated region
        $region33: #{tpu_custom_call.1} parent=31 // pred_check
          %p221 = pneg %p50
        $region34: #{tpu_custom_call.1} parent=31 // pred_check_branch
          %223 = sbr.rel (%p221) target = $region36
        $region35: #{tpu_custom_call.1} parent=31 // pred_region
          %s224 = sand.u32 %s40, 1
          %s225 = scalar_lea.sflag [#allocation4], %s224
          %s226 = sand.u32 %s40, 1
          %s227 = smul.addr %s226, 128
          %s228 = scalar_lea.vmem [#allocation3], %s227
          %230 = vsyncadd %s225, 0
          %s231 = smul.addr %s25, 32
          %s232 = smul.addr %s231, 4
          %s233 = scalar_lea.hbm %s0, %s232
          %s234 = sshll.u32 %s233, 4
          %s235 = int_to_ptr.hbm [resolvable:$true] %s234
          %s236 = sshll.u32 %s228, 4
          %s237 = int_to_ptr.vmem [resolvable:$true] %s236
          %242 = dma.hbm_to_vmem [thread:$0]  %s235, 2048, %s237, %s225, 64, 64, 4
        $region36: #{tpu_custom_call.1} parent=31 // pred_fallthru
          _
      $region32: #{tpu_custom_call.1} parent=5 // pred_fallthru
        _
      %p243 = scmp.le.s32.totalorder 1, %s18
      %p244 = scmp.lt.s32.totalorder %s18, 3
      %p245 = pnand %p243, %p244
      %p246 = pneg %p245
      // Predicated region
      $region37: #{tpu_custom_call.1} parent=5 // pred_check
        _
      $region38: #{tpu_custom_call.1} parent=5 // pred_check_branch
        %248 = sbr.rel (%p245) target = $region40
      $region39: #{tpu_custom_call.1} parent=5 // pred_region
        %s249 = ssub.s32 %s18, 1
        %s250 = sand.u32 %s43, 1
        %s251 = scalar_lea.sflag [#allocation4], %s250
        %s252 = sand.u32 %s43, 1
        %s253 = smul.addr %s252, 128
        %s254 = scalar_lea.vmem [#allocation3], %s253
        // Predicated region
        $region41: #{tpu_custom_call.1} parent=39 // pred_check
          %p255 = pneg %p56
        $region42: #{tpu_custom_call.1} parent=39 // pred_check_branch
          %257 = sbr.rel (%p255) target = $region44
        $region43: #{tpu_custom_call.1} parent=39 // pred_region
          %259 = dma.done %s251, 2048
        $region44: #{tpu_custom_call.1} parent=39 // pred_fallthru
          _
        // Predicated region
        $region45: #{tpu_custom_call.1} parent=39 // pred_check
          %p260 = pneg %p77
        $region46: #{tpu_custom_call.1} parent=39 // pred_check_branch
          %262 = sbr.rel (%p260) target = $region48
        $region47: #{tpu_custom_call.1} parent=39 // pred_region
          %264 = dma.done [#allocation7], 1024
        $region48: #{tpu_custom_call.1} parent=39 // pred_fallthru
          _
        // Predicated region
        $region49: #{tpu_custom_call.1} parent=39 // pred_check
          %p265 = pneg %p119
        $region50: #{tpu_custom_call.1} parent=39 // pred_check_branch
          %267 = sbr.rel (%p265) target = $region52
        $region51: #{tpu_custom_call.1} parent=39 // pred_region
          %269 = dma.done [#allocation7], 256
        $region52: #{tpu_custom_call.1} parent=39 // pred_fallthru
          _
        %s270 = sand.u32 %s43, 1
        %s271 = scalar_lea.sflag [#allocation4], %s270
        %s272 = sand.u32 %s43, 1
        %s273 = smul.addr %s272, 128
        %s274 = scalar_lea.vmem [#allocation3], %s273
        %p275 = pneg %p56
        %p276 = pneg %p53
        %p277 = pneg %p77
        %p278 = pneg %p74
        %p279 = pneg %p98
        %p280 = pneg %p95
        %p281 = pneg %p119
        %p282 = pneg %p116
        %p283 = pneg %p140
        %p284 = pneg %p137
        %p285 = pneg %p168
        %p286 = pneg %p165
        %s287 = sand.u32 %s155, 1
        %s288 = scalar_lea.sflag [#allocation5], %s287
        %s289 = sand.u32 %s155, 1
        %s290 = smul.addr %s289, 256
        %s291 = scalar_lea.vmem [#allocation9], %s290
        %s292 = smul.u32 16, %s28
        %293 = vst [vmem:[#allocation2 + $0x10] sm:$0xff] 0.0
        %294 = vst [vmem:[#allocation2 + $0x28] sm:$0xff] 0.0
        %295 = vst [vmem:[#allocation2 + $0x40] sm:$0xff] 0.0
        %296 = vst [vmem:[#allocation2 + $0x58] sm:$0xff] 0.0
        %297 = vst [vmem:[#allocation2 + $0x70] sm:$0xff] 0.0
        %298 = vst [vmem:[#allocation2 + $0x88] sm:$0xff] 0.0
        %299 = vst [vmem:[#allocation2 + $0xa0] sm:$0xff] 0.0
        %300 = vst [vmem:[#allocation2 + $0xb8] sm:$0xff] 0.0
        %301 = vst [vmem:[#allocation2 + $0xd0] sm:$0xff] 0.0
        %302 = vst [vmem:[#allocation2 + $0xe8] sm:$0xff] 0.0
        %303 = vst [vmem:[#allocation2 + $0x100] sm:$0xff] 0.0
        %304 = vst [vmem:[#allocation2 + $0x118] sm:$0xff] 0.0
        %305 = vst [vmem:[#allocation2 + $0x130] sm:$0xff] 0.0
        %306 = vst [vmem:[#allocation2 + $0x148] sm:$0xff] 0.0
        %307 = vst [vmem:[#allocation2 + $0x160] sm:$0xff] 0.0
        %308 = vst [vmem:[#allocation2 + $0x178] sm:$0xff] 0.0
        %309 = vst [vmem:[#allocation2 + $0x190] sm:$0xff] 0.0
        %310 = vst [vmem:[#allocation2 + $0x1a8] sm:$0xff] 0.0
        %p311 = scmp.eq.s32.totalorder %s28, 0
        // Predicated region
        $region53: #{tpu_custom_call.1} parent=39 // pred_check
          %p312 = pneg %p311
        $region54: #{tpu_custom_call.1} parent=39 // pred_check_branch
          %314 = sbr.rel (%p312) target = $region56
        $region55: #{tpu_custom_call.1} parent=39 // pred_region
          %315 = vst [vmem:[#allocation2] sm:$0xff] 0.0
          %316 = vst [vmem:[#allocation2 + $0x8] sm:$0xff] 0.0
          %s317 = scalar_lea.vmem [#allocation2], 408
          %318 = vst [vmem:[%s317] sm:$0xff] 0.0
          %319 = vst [vmem:[%s317 + $0x8] sm:$0xff] 0.0
        $region56: #{tpu_custom_call.1} parent=39 // pred_fallthru
          _
        %v320 = vld [vmem:[#allocation6] sm:$0xf]
        %v321 = vld [vmem:[#allocation6 + $0x4] sm:$0xf]
        %v322 = vld [vmem:[#allocation6 + $0x8] sm:$0xf]
        %v323 = vld [vmem:[#allocation6 + $0xc] sm:$0xf]
        %v324 = vld [vmem:[#allocation6 + $0x10] sm:$0xf]
        %v325 = vld [vmem:[#allocation6 + $0x14] sm:$0xf]
        %v326 = vld [vmem:[#allocation6 + $0x18] sm:$0xf]
        %v327 = vld [vmem:[#allocation6 + $0x1c] sm:$0xf]
        %v328 = vld [vmem:[#allocation6 + $0x20] sm:$0xf]
        %v329 = vld [vmem:[#allocation6 + $0x24] sm:$0xf]
        %v330 = vld [vmem:[#allocation6 + $0x28] sm:$0xf]
        %v331 = vld [vmem:[#allocation6 + $0x2c] sm:$0xf]
        %v332 = vld [vmem:[#allocation6 + $0x30] sm:$0xf]
        %v333 = vld [vmem:[#allocation6 + $0x34] sm:$0xf]
        %v334 = vld [vmem:[#allocation6 + $0x38] sm:$0xf]
        %v335 = vld [vmem:[#allocation6 + $0x3c] sm:$0xf]
        %v336 = vld [vmem:[%s2] sm:$0x1]
        %s337 = smul.u32 %s28, 16
        %s338 = smul.u32 %s337, 2
        %s339 = smul.addr %s338, 4
        %s340 = scalar_lea.vmem %s254, %s339 [#allocation3]
        %v341 = vld [vmem:[%s340] sm:$0xf]
        %v342 = vld [vmem:[%s340 + $0x4] sm:$0xf]
        %v343 = vld [vmem:[%s340 + $0x8] sm:$0xf]
        %v344 = vld [vmem:[%s340 + $0xc] sm:$0xf]
        %v345 = vld [vmem:[%s340 + $0x10] sm:$0xf]
        %v346 = vld [vmem:[%s340 + $0x14] sm:$0xf]
        %v347 = vld [vmem:[%s340 + $0x18] sm:$0xf]
        %v348 = vld [vmem:[%s340 + $0x1c] sm:$0xf]
        %v349 = vld [vmem:[%s340 + $0x20] sm:$0xf]
        %v350 = vld [vmem:[%s340 + $0x24] sm:$0xf]
        %v351 = vld [vmem:[%s340 + $0x28] sm:$0xf]
        %v352 = vld [vmem:[%s340 + $0x2c] sm:$0xf]
        %v353 = vld [vmem:[%s340 + $0x30] sm:$0xf]
        %v354 = vld [vmem:[%s340 + $0x34] sm:$0xf]
        %v355 = vld [vmem:[%s340 + $0x38] sm:$0xf]
        %v356 = vld [vmem:[%s340 + $0x3c] sm:$0xf]
        %v357 = vld [vmem:[%s340 + $0x40] sm:$0xf]
        %v358 = vld [vmem:[%s340 + $0x44] sm:$0xf]
        %v359 = vld [vmem:[%s340 + $0x48] sm:$0xf]
        %v360 = vld [vmem:[%s340 + $0x4c] sm:$0xf]
        %v361 = vld [vmem:[%s340 + $0x50] sm:$0xf]
        %v362 = vld [vmem:[%s340 + $0x54] sm:$0xf]
        %v363 = vld [vmem:[%s340 + $0x58] sm:$0xf]
        %v364 = vld [vmem:[%s340 + $0x5c] sm:$0xf]
        %v365 = vld [vmem:[%s340 + $0x60] sm:$0xf]
        %v366 = vld [vmem:[%s340 + $0x64] sm:$0xf]
        %v367 = vld [vmem:[%s340 + $0x68] sm:$0xf]
        %v368 = vld [vmem:[%s340 + $0x6c] sm:$0xf]
        %v369 = vld [vmem:[%s340 + $0x70] sm:$0xf]
        %v370 = vld [vmem:[%s340 + $0x74] sm:$0xf]
        %v371 = vld [vmem:[%s340 + $0x78] sm:$0xf]
        %v372 = vld [vmem:[%s340 + $0x7c] sm:$0xf]
        %v374 = vperm.slane %v336, 0
        %v408 = vunpack.c.l.b16 %v341
        %v409 = vunpack.c.l.b16 %v342
        %v410 = vunpack.c.l.b16 %v343
        %v411 = vunpack.c.l.b16 %v344
        %v412 = vunpack.c.l.b16 %v345
        %v413 = vunpack.c.l.b16 %v346
        %v414 = vunpack.c.l.b16 %v347
        %v415 = vunpack.c.l.b16 %v348
        %v416 = vunpack.c.l.b16 %v349
        %v417 = vunpack.c.l.b16 %v350
        %v418 = vunpack.c.l.b16 %v351
        %v419 = vunpack.c.l.b16 %v352
        %v420 = vunpack.c.l.b16 %v353
        %v421 = vunpack.c.l.b16 %v354
        %v422 = vunpack.c.l.b16 %v355
        %v423 = vunpack.c.l.b16 %v356
        %v424 = vunpack.c.l.b16 %v357
        %v425 = vunpack.c.l.b16 %v358
        %v426 = vunpack.c.l.b16 %v359
        %v427 = vunpack.c.l.b16 %v360
        %v428 = vunpack.c.l.b16 %v361
        %v429 = vunpack.c.l.b16 %v362
        %v430 = vunpack.c.l.b16 %v363
        %v431 = vunpack.c.l.b16 %v364
        %v432 = vunpack.c.l.b16 %v365
        %v433 = vunpack.c.l.b16 %v366
        %v434 = vunpack.c.l.b16 %v367
        %v435 = vunpack.c.l.b16 %v368
        %v436 = vunpack.c.l.b16 %v369
        %v437 = vunpack.c.l.b16 %v370
        %v438 = vunpack.c.l.b16 %v371
        %v439 = vunpack.c.l.b16 %v372
        %v440 = vpack.c.b16 %v409, %v408
        %v441 = vpack.c.b16 %v411, %v410
        %v442 = vpack.c.b16 %v413, %v412
        %v443 = vpack.c.b16 %v415, %v414
        %v444 = vpack.c.b16 %v417, %v416
        %v445 = vpack.c.b16 %v419, %v418
        %v446 = vpack.c.b16 %v421, %v420
        %v447 = vpack.c.b16 %v423, %v422
        %v448 = vpack.c.b16 %v425, %v424
        %v449 = vpack.c.b16 %v427, %v426
        %v450 = vpack.c.b16 %v429, %v428
        %v451 = vpack.c.b16 %v431, %v430
        %v452 = vpack.c.b16 %v433, %v432
        %v453 = vpack.c.b16 %v435, %v434
        %v454 = vpack.c.b16 %v437, %v436
        %v455 = vpack.c.b16 %v439, %v438
        %v488 = vunpack.c.l.b16 %v320
        %v489 = vunpack.c.l.b16 %v321
        %v490 = vunpack.c.l.b16 %v322
        %v491 = vunpack.c.l.b16 %v323
        %v492 = vunpack.c.l.b16 %v324
        %v493 = vunpack.c.l.b16 %v325
        %v494 = vunpack.c.l.b16 %v326
        %v495 = vunpack.c.l.b16 %v327
        %v496 = vunpack.c.l.b16 %v328
        %v497 = vunpack.c.l.b16 %v329
        %v498 = vunpack.c.l.b16 %v330
        %v499 = vunpack.c.l.b16 %v331
        %v500 = vunpack.c.l.b16 %v332
        %v501 = vunpack.c.l.b16 %v333
        %v502 = vunpack.c.l.b16 %v334
        %v503 = vunpack.c.l.b16 %v335
        %v504 = vpack.c.b16 %v489, %v488
        %v505 = vpack.c.b16 %v491, %v490
        %v506 = vpack.c.b16 %v493, %v492
        %v507 = vpack.c.b16 %v495, %v494
        %v508 = vpack.c.b16 %v497, %v496
        %v509 = vpack.c.b16 %v499, %v498
        %v510 = vpack.c.b16 %v501, %v500
        %v511 = vpack.c.b16 %v503, %v502
        %520 = vmatpush.bf16.msra.mxu0 %v511
        %521 = vmatpush.bf16.msra.mxu0 %v510
        %522 = vmatpush.bf16.msra.mxu0 %v509
        %523 = vmatpush.bf16.msra.mxu0 %v508
        %524 = vmatpush.bf16.msra.mxu0 %v507
        %525 = vmatpush.bf16.msra.mxu0 %v506
        %526 = vmatpush.bf16.msra.mxu0 %v505
        %527 = vmatpush.bf16.msra.mxu0 %v504
        %528 = vmatmul.bf16.gmra.mxu0 %v440
        %v529 = vpop.f32.mrf.mxu0
        %v530 = vadd.f32 %v374, %v529
        %v531 = vpop.f32.mrf.mxu0
        %v532 = vadd.f32 %v374, %v531
        %533 = vmatmul.bf16.gmra.mxu0 %v441
        %v534 = vpop.f32.mrf.mxu0
        %v535 = vadd.f32 %v374, %v534
        %v536 = vpop.f32.mrf.mxu0
        %v537 = vadd.f32 %v374, %v536
        %538 = vmatmul.bf16.gmra.mxu0 %v442
        %v539 = vpop.f32.mrf.mxu0
        %v540 = vadd.f32 %v374, %v539
        %v541 = vpop.f32.mrf.mxu0
        %v542 = vadd.f32 %v374, %v541
        %543 = vmatmul.bf16.gmra.mxu0 %v443
        %v544 = vpop.f32.mrf.mxu0
        %v545 = vadd.f32 %v374, %v544
        %v546 = vpop.f32.mrf.mxu0
        %v547 = vadd.f32 %v374, %v546
        %548 = vmatmul.bf16.gmra.mxu0 %v444
        %v549 = vpop.f32.mrf.mxu0
        %v550 = vadd.f32 %v374, %v549
        %v551 = vpop.f32.mrf.mxu0
        %v552 = vadd.f32 %v374, %v551
        %553 = vmatmul.bf16.gmra.mxu0 %v445
        %v554 = vpop.f32.mrf.mxu0
        %v555 = vadd.f32 %v374, %v554
        %v556 = vpop.f32.mrf.mxu0
        %v557 = vadd.f32 %v374, %v556
        %558 = vmatmul.bf16.gmra.mxu0 %v446
        %v559 = vpop.f32.mrf.mxu0
        %v560 = vadd.f32 %v374, %v559
        %v561 = vpop.f32.mrf.mxu0
        %v562 = vadd.f32 %v374, %v561
        %563 = vmatmul.bf16.gmra.mxu0 %v447
        %v564 = vpop.f32.mrf.mxu0
        %v565 = vadd.f32 %v374, %v564
        %v566 = vpop.f32.mrf.mxu0
        %v567 = vadd.f32 %v374, %v566
        %568 = vmatmul.bf16.gmra.mxu0 %v448
        %v569 = vpop.f32.mrf.mxu0
        %v570 = vadd.f32 %v374, %v569
        %v571 = vpop.f32.mrf.mxu0
        %v572 = vadd.f32 %v374, %v571
        %573 = vmatmul.bf16.gmra.mxu0 %v449
        %v574 = vpop.f32.mrf.mxu0
        %v575 = vadd.f32 %v374, %v574
        %v576 = vpop.f32.mrf.mxu0
        %v577 = vadd.f32 %v374, %v576
        %578 = vmatmul.bf16.gmra.mxu0 %v450
        %v579 = vpop.f32.mrf.mxu0
        %v580 = vadd.f32 %v374, %v579
        %v581 = vpop.f32.mrf.mxu0
        %v582 = vadd.f32 %v374, %v581
        %583 = vmatmul.bf16.gmra.mxu0 %v451
        %v584 = vpop.f32.mrf.mxu0
        %v585 = vadd.f32 %v374, %v584
        %v586 = vpop.f32.mrf.mxu0
        %v587 = vadd.f32 %v374, %v586
        %588 = vmatmul.bf16.gmra.mxu0 %v452
        %v589 = vpop.f32.mrf.mxu0
        %v590 = vadd.f32 %v374, %v589
        %v591 = vpop.f32.mrf.mxu0
        %v592 = vadd.f32 %v374, %v591
        %593 = vmatmul.bf16.gmra.mxu0 %v453
        %v594 = vpop.f32.mrf.mxu0
        %v595 = vadd.f32 %v374, %v594
        %v596 = vpop.f32.mrf.mxu0
        %v597 = vadd.f32 %v374, %v596
        %598 = vmatmul.bf16.gmra.mxu0 %v454
        %v599 = vpop.f32.mrf.mxu0
        %v600 = vadd.f32 %v374, %v599
        %v601 = vpop.f32.mrf.mxu0
        %v602 = vadd.f32 %v374, %v601
        %603 = vmatmul.bf16.gmra.mxu0 %v455
        %v604 = vpop.f32.mrf.mxu0
        %v605 = vadd.f32 %v374, %v604
        %v606 = vpop.f32.mrf.mxu0
        %v607 = vadd.f32 %v374, %v606
        %608 = vdwg.mxu0
        %s609 = scalar_lea.vmem [#allocation2], 24
        %610 = vst [vmem:[%s609] sm:$0xff] %v530
        %611 = vst [vmem:[%s609 + $0x8] sm:$0xff] %v532
        %612 = vst [vmem:[%s609 + $0x18] sm:$0xff] %v535
        %613 = vst [vmem:[%s609 + $0x20] sm:$0xff] %v537
        %614 = vst [vmem:[%s609 + $0x30] sm:$0xff] %v540
        %615 = vst [vmem:[%s609 + $0x38] sm:$0xff] %v542
        %616 = vst [vmem:[%s609 + $0x48] sm:$0xff] %v545
        %617 = vst [vmem:[%s609 + $0x50] sm:$0xff] %v547
        %618 = vst [vmem:[%s609 + $0x60] sm:$0xff] %v550
        %619 = vst [vmem:[%s609 + $0x68] sm:$0xff] %v552
        %620 = vst [vmem:[%s609 + $0x78] sm:$0xff] %v555
        %621 = vst [vmem:[%s609 + $0x80] sm:$0xff] %v557
        %622 = vst [vmem:[%s609 + $0x90] sm:$0xff] %v560
        %623 = vst [vmem:[%s609 + $0x98] sm:$0xff] %v562
        %624 = vst [vmem:[%s609 + $0xa8] sm:$0xff] %v565
        %625 = vst [vmem:[%s609 + $0xb0] sm:$0xff] %v567
        %626 = vst [vmem:[%s609 + $0xc0] sm:$0xff] %v570
        %627 = vst [vmem:[%s609 + $0xc8] sm:$0xff] %v572
        %628 = vst [vmem:[%s609 + $0xd8] sm:$0xff] %v575
        %629 = vst [vmem:[%s609 + $0xe0] sm:$0xff] %v577
        %630 = vst [vmem:[%s609 + $0xf0] sm:$0xff] %v580
        %631 = vst [vmem:[%s609 + $0xf8] sm:$0xff] %v582
        %632 = vst [vmem:[%s609 + $0x108] sm:$0xff] %v585
        %633 = vst [vmem:[%s609 + $0x110] sm:$0xff] %v587
        %634 = vst [vmem:[%s609 + $0x120] sm:$0xff] %v590
        %635 = vst [vmem:[%s609 + $0x128] sm:$0xff] %v592
        %636 = vst [vmem:[%s609 + $0x138] sm:$0xff] %v595
        %637 = vst [vmem:[%s609 + $0x140] sm:$0xff] %v597
        %638 = vst [vmem:[%s609 + $0x150] sm:$0xff] %v600
        %639 = vst [vmem:[%s609 + $0x158] sm:$0xff] %v602
        %640 = vst [vmem:[%s609 + $0x168] sm:$0xff] %v605
        %641 = vst [vmem:[%s609 + $0x170] sm:$0xff] %v607
        %p642 = scmp.gt.s32.totalorder %s28, 0
        // Predicated region
        $region57: #{tpu_custom_call.1} parent=39 // pred_check
          %p643 = pneg %p642
        $region58: #{tpu_custom_call.1} parent=39 // pred_check_branch
          %645 = sbr.rel (%p643) target = $region60
        $region59: #{tpu_custom_call.1} parent=39 // pred_region
          %s646 = ssub.s32 %s337, 1
          %s647 = smul.u32 %s646, 2
          %s648 = smul.addr %s647, 4
          %s649 = scalar_lea.vmem %s254, %s648 [#allocation3]
          %v650 = vld [vmem:[%s649] sm:$0xf]
          %v651 = vld [vmem:[%s649 + $0x4] sm:$0xf]
          %v654 = vunpack.c.l.b16 %v650
          %v655 = vunpack.c.l.b16 %v651
          %v656 = vpack.c.b16 %v655, %v654
          %658 = vmatpush.bf16.msra.mxu0 %v511
          %659 = vmatpush.bf16.msra.mxu0 %v510
          %660 = vmatpush.bf16.msra.mxu0 %v509
          %661 = vmatpush.bf16.msra.mxu0 %v508
          %662 = vmatpush.bf16.msra.mxu0 %v507
          %663 = vmatpush.bf16.msra.mxu0 %v506
          %664 = vmatpush.bf16.msra.mxu0 %v505
          %665 = vmatpush.bf16.msra.mxu0 %v504
          %666 = vmatmul.bf16.gmra.mxu0 %v656
          %v667 = vpop.f32.mrf.mxu0
          %v668 = vadd.f32 %v374, %v667
          %v669 = vpop.f32.mrf.mxu0
          %v670 = vadd.f32 %v374, %v669
          %671 = vdwg.mxu0
          %672 = vst [vmem:[#allocation2] sm:$0xff] %v668
          %673 = vst [vmem:[#allocation2 + $0x8] sm:$0xff] %v670
        $region60: #{tpu_custom_call.1} parent=39 // pred_fallthru
          _
        %p674 = scmp.lt.s32.totalorder %s28, 0
        // Predicated region
        $region61: #{tpu_custom_call.1} parent=39 // pred_check
          %p675 = pneg %p674
        $region62: #{tpu_custom_call.1} parent=39 // pred_check_branch
          %677 = sbr.rel (%p675) target = $region64
        $region63: #{tpu_custom_call.1} parent=39 // pred_region
          %s678 = sadd.s32 %s337, 16
          %s679 = smul.u32 %s678, 2
          %s680 = smul.addr %s679, 4
          %s681 = scalar_lea.vmem %s254, %s680 [#allocation3]
          %v682 = vld [vmem:[%s681] sm:$0xf]
          %v683 = vld [vmem:[%s681 + $0x4] sm:$0xf]
          %v686 = vunpack.c.l.b16 %v682
          %v687 = vunpack.c.l.b16 %v683
          %v688 = vpack.c.b16 %v687, %v686
          %690 = vmatpush.bf16.msra.mxu0 %v511
          %691 = vmatpush.bf16.msra.mxu0 %v510
          %692 = vmatpush.bf16.msra.mxu0 %v509
          %693 = vmatpush.bf16.msra.mxu0 %v508
          %694 = vmatpush.bf16.msra.mxu0 %v507
          %695 = vmatpush.bf16.msra.mxu0 %v506
          %696 = vmatpush.bf16.msra.mxu0 %v505
          %697 = vmatpush.bf16.msra.mxu0 %v504
          %698 = vmatmul.bf16.gmra.mxu0 %v688
          %v699 = vpop.f32.mrf.mxu0
          %v700 = vadd.f32 %v374, %v699
          %v701 = vpop.f32.mrf.mxu0
          %v702 = vadd.f32 %v374, %v701
          %703 = vdwg.mxu0
          %s704 = scalar_lea.vmem [#allocation2], 408
          %705 = vst [vmem:[%s704] sm:$0xff] %v700
          %706 = vst [vmem:[%s704 + $0x8] sm:$0xff] %v702
        $region64: #{tpu_custom_call.1} parent=39 // pred_fallthru
          _
        %v707 = vld [vmem:[#allocation8] sm:$0xff]
        %v708 = vld [vmem:[#allocation8 + $0x8] sm:$0x1]
        %v709 = vld [vmem:[%s4] sm:$0x1]
        %v710 = vld [vmem:[#allocation2] sm:$0xff]
        %v711 = vld [vmem:[#allocation2 + $0x8] sm:$0xff]
        %v712 = vld [vmem:[#allocation2 + $0x10] sm:$0xff]
        %v713 = vld [vmem:[#allocation2 + $0x18] sm:$0xff]
        %v714 = vld [vmem:[#allocation2 + $0x20] sm:$0xff]
        %v715 = vld [vmem:[#allocation2 + $0x28] sm:$0xff]
        %v716 = vld [vmem:[#allocation2 + $0x30] sm:$0xff]
        %v717 = vld [vmem:[#allocation2 + $0x38] sm:$0xff]
        %v718 = vld [vmem:[#allocation2 + $0x40] sm:$0xff]
        %v719 = vld [vmem:[#allocation2 + $0x48] sm:$0xff]
        %v720 = vld [vmem:[#allocation2 + $0x50] sm:$0xff]
        %v721 = vld [vmem:[#allocation2 + $0x58] sm:$0xff]
        %v722 = vrot.slane %v710, 7
        %v723 = vrot.slane %v713, 7
        %v724 = vrot.slane %v716, 7
        %v725 = vrot.slane %v719, 7
        %v726 = vrot.slane %v711, 7
        %v727 = vrot.slane %v714, 7
        %v728 = vrot.slane %v717, 7
        %v729 = vrot.slane %v720, 7
        %v730 = vrot.slane %v712, 7
        %v731 = vrot.slane %v715, 7
        %v732 = vrot.slane %v718, 7
        %v733 = vrot.slane %v721, 7
        %v734 = vlaneseq
        %v735 = vshrl.u32 %v734, 7
        %vm736 = vcmp.lt.s32.totalorder %v735, 1
        %v737 = vsel %vm736, %v722, %v726
        %v738 = vsel %vm736, %v723, %v727
        %v739 = vsel %vm736, %v724, %v728
        %v740 = vsel %vm736, %v725, %v729
        %v741 = vsel %vm736, %v730, %v722
        %v742 = vsel %vm736, %v731, %v723
        %v743 = vsel %vm736, %v732, %v724
        %v744 = vsel %vm736, %v733, %v725
        %v745 = vperm.slane %v707, 0
        %v746 = vmul.f32 %v741, %v745
        %v747 = vmul.f32 %v737, %v745
        %v748 = vmul.f32 %v742, %v745
        %v749 = vmul.f32 %v738, %v745
        %v750 = vmul.f32 %v743, %v745
        %v751 = vmul.f32 %v739, %v745
        %v752 = vmul.f32 %v744, %v745
        %v753 = vmul.f32 %v740, %v745
        %v754 = vperm.slane %v707, 1
        %v755 = vmul.f32 %v710, %v754
        %v756 = vmul.f32 %v711, %v754
        %v757 = vmul.f32 %v713, %v754
        %v758 = vmul.f32 %v714, %v754
        %v759 = vmul.f32 %v716, %v754
        %v760 = vmul.f32 %v717, %v754
        %v761 = vmul.f32 %v719, %v754
        %v762 = vmul.f32 %v720, %v754
        %v763 = vadd.f32 %v746, %v755
        %v764 = vadd.f32 %v747, %v756
        %v765 = vadd.f32 %v748, %v757
        %v766 = vadd.f32 %v749, %v758
        %v767 = vadd.f32 %v750, %v759
        %v768 = vadd.f32 %v751, %v760
        %v769 = vadd.f32 %v752, %v761
        %v770 = vadd.f32 %v753, %v762
        %v771 = vrot.slane %v710, 1
        %v772 = vrot.slane %v713, 1
        %v773 = vrot.slane %v716, 1
        %v774 = vrot.slane %v719, 1
        %v775 = vrot.slane %v711, 1
        %v776 = vrot.slane %v714, 1
        %v777 = vrot.slane %v717, 1
        %v778 = vrot.slane %v720, 1
        %v779 = vrot.slane %v712, 1
        %v780 = vrot.slane %v715, 1
        %v781 = vrot.slane %v718, 1
        %v782 = vrot.slane %v721, 1
        %vm783 = vcmp.lt.s32.totalorder %v735, 7
        %v784 = vsel %vm783, %v775, %v779
        %v785 = vsel %vm783, %v776, %v780
        %v786 = vsel %vm783, %v777, %v781
        %v787 = vsel %vm783, %v778, %v782
        %v788 = vsel %vm783, %v771, %v775
        %v789 = vsel %vm783, %v772, %v776
        %v790 = vsel %vm783, %v773, %v777
        %v791 = vsel %vm783, %v774, %v778
        %v792 = vperm.slane %v707, 2
        %v793 = vmul.f32 %v788, %v792
        %v794 = vmul.f32 %v784, %v792
        %v795 = vmul.f32 %v789, %v792
        %v796 = vmul.f32 %v785, %v792
        %v797 = vmul.f32 %v790, %v792
        %v798 = vmul.f32 %v786, %v792
        %v799 = vmul.f32 %v791, %v792
        %v800 = vmul.f32 %v787, %v792
        %v801 = vadd.f32 %v763, %v793
        %v802 = vadd.f32 %v764, %v794
        %v803 = vadd.f32 %v765, %v795
        %v804 = vadd.f32 %v766, %v796
        %v805 = vadd.f32 %v767, %v797
        %v806 = vadd.f32 %v768, %v798
        %v807 = vadd.f32 %v769, %v799
        %v808 = vadd.f32 %v770, %v800
        %v809 = vld [vmem:[%s609] sm:$0xff]
        %v810 = vld [vmem:[%s609 + $0x8] sm:$0xff]
        %v811 = vld [vmem:[%s609 + $0x10] sm:$0xff]
        %v812 = vld [vmem:[%s609 + $0x18] sm:$0xff]
        %v813 = vld [vmem:[%s609 + $0x20] sm:$0xff]
        %v814 = vld [vmem:[%s609 + $0x28] sm:$0xff]
        %v815 = vld [vmem:[%s609 + $0x30] sm:$0xff]
        %v816 = vld [vmem:[%s609 + $0x38] sm:$0xff]
        %v817 = vld [vmem:[%s609 + $0x40] sm:$0xff]
        %v818 = vld [vmem:[%s609 + $0x48] sm:$0xff]
        %v819 = vld [vmem:[%s609 + $0x50] sm:$0xff]
        %v820 = vld [vmem:[%s609 + $0x58] sm:$0xff]
        %v821 = vrot.slane %v809, 7
        %v822 = vrot.slane %v812, 7
        %v823 = vrot.slane %v815, 7
        %v824 = vrot.slane %v818, 7
        %v825 = vrot.slane %v810, 7
        %v826 = vrot.slane %v813, 7
        %v827 = vrot.slane %v816, 7
        %v828 = vrot.slane %v819, 7
        %v829 = vrot.slane %v811, 7
        %v830 = vrot.slane %v814, 7
        %v831 = vrot.slane %v817, 7
        %v832 = vrot.slane %v820, 7
        %v833 = vsel %vm736, %v821, %v825
        %v834 = vsel %vm736, %v822, %v826
        %v835 = vsel %vm736, %v823, %v827
        %v836 = vsel %vm736, %v824, %v828
        %v837 = vsel %vm736, %v829, %v821
        %v838 = vsel %vm736, %v830, %v822
        %v839 = vsel %vm736, %v831, %v823
        %v840 = vsel %vm736, %v832, %v824
        %v841 = vperm.slane %v707, 3
        %v842 = vmul.f32 %v837, %v841
        %v843 = vmul.f32 %v833, %v841
        %v844 = vmul.f32 %v838, %v841
        %v845 = vmul.f32 %v834, %v841
        %v846 = vmul.f32 %v839, %v841
        %v847 = vmul.f32 %v835, %v841
        %v848 = vmul.f32 %v840, %v841
        %v849 = vmul.f32 %v836, %v841
        %v850 = vadd.f32 %v801, %v842
        %v851 = vadd.f32 %v802, %v843
        %v852 = vadd.f32 %v803, %v844
        %v853 = vadd.f32 %v804, %v845
        %v854 = vadd.f32 %v805, %v846
        %v855 = vadd.f32 %v806, %v847
        %v856 = vadd.f32 %v807, %v848
        %v857 = vadd.f32 %v808, %v849
        %v858 = vperm.slane %v707, 4
        %v859 = vmul.f32 %v809, %v858
        %v860 = vmul.f32 %v810, %v858
        %v861 = vmul.f32 %v812, %v858
        %v862 = vmul.f32 %v813, %v858
        %v863 = vmul.f32 %v815, %v858
        %v864 = vmul.f32 %v816, %v858
        %v865 = vmul.f32 %v818, %v858
        %v866 = vmul.f32 %v819, %v858
        %v867 = vadd.f32 %v850, %v859
        %v868 = vadd.f32 %v851, %v860
        %v869 = vadd.f32 %v852, %v861
        %v870 = vadd.f32 %v853, %v862
        %v871 = vadd.f32 %v854, %v863
        %v872 = vadd.f32 %v855, %v864
        %v873 = vadd.f32 %v856, %v865
        %v874 = vadd.f32 %v857, %v866
        %v875 = vrot.slane %v809, 1
        %v876 = vrot.slane %v812, 1
        %v877 = vrot.slane %v815, 1
        %v878 = vrot.slane %v818, 1
        %v879 = vrot.slane %v810, 1
        %v880 = vrot.slane %v813, 1
        %v881 = vrot.slane %v816, 1
        %v882 = vrot.slane %v819, 1
        %v883 = vrot.slane %v811, 1
        %v884 = vrot.slane %v814, 1
        %v885 = vrot.slane %v817, 1
        %v886 = vrot.slane %v820, 1
        %v887 = vsel %vm783, %v879, %v883
        %v888 = vsel %vm783, %v880, %v884
        %v889 = vsel %vm783, %v881, %v885
        %v890 = vsel %vm783, %v882, %v886
        %v891 = vsel %vm783, %v875, %v879
        %v892 = vsel %vm783, %v876, %v880
        %v893 = vsel %vm783, %v877, %v881
        %v894 = vsel %vm783, %v878, %v882
        %v895 = vperm.slane %v707, 5
        %v896 = vmul.f32 %v891, %v895
        %v897 = vmul.f32 %v887, %v895
        %v898 = vmul.f32 %v892, %v895
        %v899 = vmul.f32 %v888, %v895
        %v900 = vmul.f32 %v893, %v895
        %v901 = vmul.f32 %v889, %v895
        %v902 = vmul.f32 %v894, %v895
        %v903 = vmul.f32 %v890, %v895
        %v904 = vadd.f32 %v867, %v896
        %v905 = vadd.f32 %v868, %v897
        %v906 = vadd.f32 %v869, %v898
        %v907 = vadd.f32 %v870, %v899
        %v908 = vadd.f32 %v871, %v900
        %v909 = vadd.f32 %v872, %v901
        %v910 = vadd.f32 %v873, %v902
        %v911 = vadd.f32 %v874, %v903
        %s912 = scalar_lea.vmem [#allocation2], 48
        %v913 = vld [vmem:[%s912] sm:$0xff]
        %v914 = vld [vmem:[%s912 + $0x8] sm:$0xff]
        %v915 = vld [vmem:[%s912 + $0x10] sm:$0xff]
        %v916 = vld [vmem:[%s912 + $0x18] sm:$0xff]
        %v917 = vld [vmem:[%s912 + $0x20] sm:$0xff]
        %v918 = vld [vmem:[%s912 + $0x28] sm:$0xff]
        %v919 = vld [vmem:[%s912 + $0x30] sm:$0xff]
        %v920 = vld [vmem:[%s912 + $0x38] sm:$0xff]
        %v921 = vld [vmem:[%s912 + $0x40] sm:$0xff]
        %v922 = vld [vmem:[%s912 + $0x48] sm:$0xff]
        %v923 = vld [vmem:[%s912 + $0x50] sm:$0xff]
        %v924 = vld [vmem:[%s912 + $0x58] sm:$0xff]
        %v925 = vrot.slane %v913, 7
        %v926 = vrot.slane %v916, 7
        %v927 = vrot.slane %v919, 7
        %v928 = vrot.slane %v922, 7
        %v929 = vrot.slane %v914, 7
        %v930 = vrot.slane %v917, 7
        %v931 = vrot.slane %v920, 7
        %v932 = vrot.slane %v923, 7
        %v933 = vrot.slane %v915, 7
        %v934 = vrot.slane %v918, 7
        %v935 = vrot.slane %v921, 7
        %v936 = vrot.slane %v924, 7
        %v937 = vsel %vm736, %v925, %v929
        %v938 = vsel %vm736, %v926, %v930
        %v939 = vsel %vm736, %v927, %v931
        %v940 = vsel %vm736, %v928, %v932
        %v941 = vsel %vm736, %v933, %v925
        %v942 = vsel %vm736, %v934, %v926
        %v943 = vsel %vm736, %v935, %v927
        %v944 = vsel %vm736, %v936, %v928
        %v945 = vperm.slane %v707, 6
        %v946 = vmul.f32 %v941, %v945
        %v947 = vmul.f32 %v937, %v945
        %v948 = vmul.f32 %v942, %v945
        %v949 = vmul.f32 %v938, %v945
        %v950 = vmul.f32 %v943, %v945
        %v951 = vmul.f32 %v939, %v945
        %v952 = vmul.f32 %v944, %v945
        %v953 = vmul.f32 %v940, %v945
        %v954 = vadd.f32 %v904, %v946
        %v955 = vadd.f32 %v905, %v947
        %v956 = vadd.f32 %v906, %v948
        %v957 = vadd.f32 %v907, %v949
        %v958 = vadd.f32 %v908, %v950
        %v959 = vadd.f32 %v909, %v951
        %v960 = vadd.f32 %v910, %v952
        %v961 = vadd.f32 %v911, %v953
        %v962 = vperm.slane %v707, 7
        %v963 = vmul.f32 %v913, %v962
        %v964 = vmul.f32 %v914, %v962
        %v965 = vmul.f32 %v916, %v962
        %v966 = vmul.f32 %v917, %v962
        %v967 = vmul.f32 %v919, %v962
        %v968 = vmul.f32 %v920, %v962
        %v969 = vmul.f32 %v922, %v962
        %v970 = vmul.f32 %v923, %v962
        %v971 = vadd.f32 %v954, %v963
        %v972 = vadd.f32 %v955, %v964
        %v973 = vadd.f32 %v956, %v965
        %v974 = vadd.f32 %v957, %v966
        %v975 = vadd.f32 %v958, %v967
        %v976 = vadd.f32 %v959, %v968
        %v977 = vadd.f32 %v960, %v969
        %v978 = vadd.f32 %v961, %v970
        %v979 = vrot.slane %v913, 1
        %v980 = vrot.slane %v916, 1
        %v981 = vrot.slane %v919, 1
        %v982 = vrot.slane %v922, 1
        %v983 = vrot.slane %v914, 1
        %v984 = vrot.slane %v917, 1
        %v985 = vrot.slane %v920, 1
        %v986 = vrot.slane %v923, 1
        %v987 = vrot.slane %v915, 1
        %v988 = vrot.slane %v918, 1
        %v989 = vrot.slane %v921, 1
        %v990 = vrot.slane %v924, 1
        %v991 = vsel %vm783, %v983, %v987
        %v992 = vsel %vm783, %v984, %v988
        %v993 = vsel %vm783, %v985, %v989
        %v994 = vsel %vm783, %v986, %v990
        %v995 = vsel %vm783, %v979, %v983
        %v996 = vsel %vm783, %v980, %v984
        %v997 = vsel %vm783, %v981, %v985
        %v998 = vsel %vm783, %v982, %v986
        %v999 = vperm.slane %v708, 0
        %v1000 = vmul.f32 %v995, %v999
        %v1001 = vmul.f32 %v991, %v999
        %v1002 = vmul.f32 %v996, %v999
        %v1003 = vmul.f32 %v992, %v999
        %v1004 = vmul.f32 %v997, %v999
        %v1005 = vmul.f32 %v993, %v999
        %v1006 = vmul.f32 %v998, %v999
        %v1007 = vmul.f32 %v994, %v999
        %v1008 = vadd.f32 %v971, %v1000
        %v1009 = vadd.f32 %v972, %v1001
        %v1010 = vadd.f32 %v973, %v1002
        %v1011 = vadd.f32 %v974, %v1003
        %v1012 = vadd.f32 %v975, %v1004
        %v1013 = vadd.f32 %v976, %v1005
        %v1014 = vadd.f32 %v977, %v1006
        %v1015 = vadd.f32 %v978, %v1007
        %v1017 = vperm.slane %v709, 0
        %v1019 = vadd.f32 %v1008, %v1017
        %v1020 = vadd.f32 %v1009, %v1017
        %v1021 = vadd.f32 %v1010, %v1017
        %v1022 = vadd.f32 %v1011, %v1017
        %v1023 = vadd.f32 %v1012, %v1017
        %v1024 = vadd.f32 %v1013, %v1017
        %v1025 = vadd.f32 %v1014, %v1017
        %v1026 = vadd.f32 %v1015, %v1017
        %v1027 = vmax.f32 %v1019, 0.0
        %v1028 = vmax.f32 %v1020, 0.0
        %v1029 = vmax.f32 %v1021, 0.0
        %v1030 = vmax.f32 %v1022, 0.0
        %v1031 = vmax.f32 %v1023, 0.0
        %v1032 = vmax.f32 %v1024, 0.0
        %v1033 = vmax.f32 %v1025, 0.0
        %v1034 = vmax.f32 %v1026, 0.0
        %1035 = vst [vmem:[%s291] sm:$0xff] %v1027
        %1036 = vst [vmem:[%s291 + $0x8] sm:$0xff] %v1028
        %1037 = vst [vmem:[%s291 + $0x10] sm:$0xff] %v1029
        %1038 = vst [vmem:[%s291 + $0x18] sm:$0xff] %v1030
        %1039 = vst [vmem:[%s291 + $0x20] sm:$0xff] %v1031
        %1040 = vst [vmem:[%s291 + $0x28] sm:$0xff] %v1032
        %1041 = vst [vmem:[%s291 + $0x30] sm:$0xff] %v1033
        %1042 = vst [vmem:[%s291 + $0x38] sm:$0xff] %v1034
        %s1043 = scalar_lea.vmem [#allocation2], 96
        %v1044 = vld [vmem:[%s1043] sm:$0xff]
        %v1045 = vld [vmem:[%s1043 + $0x8] sm:$0xff]
        %v1046 = vld [vmem:[%s1043 + $0x10] sm:$0xff]
        %v1047 = vld [vmem:[%s1043 + $0x18] sm:$0xff]
        %v1048 = vld [vmem:[%s1043 + $0x20] sm:$0xff]
        %v1049 = vld [vmem:[%s1043 + $0x28] sm:$0xff]
        %v1050 = vld [vmem:[%s1043 + $0x30] sm:$0xff]
        %v1051 = vld [vmem:[%s1043 + $0x38] sm:$0xff]
        %v1052 = vld [vmem:[%s1043 + $0x40] sm:$0xff]
        %v1053 = vld [vmem:[%s1043 + $0x48] sm:$0xff]
        %v1054 = vld [vmem:[%s1043 + $0x50] sm:$0xff]
        %v1055 = vld [vmem:[%s1043 + $0x58] sm:$0xff]
        %v1056 = vrot.slane %v1044, 7
        %v1057 = vrot.slane %v1047, 7
        %v1058 = vrot.slane %v1050, 7
        %v1059 = vrot.slane %v1053, 7
        %v1060 = vrot.slane %v1045, 7
        %v1061 = vrot.slane %v1048, 7
        %v1062 = vrot.slane %v1051, 7
        %v1063 = vrot.slane %v1054, 7
        %v1064 = vrot.slane %v1046, 7
        %v1065 = vrot.slane %v1049, 7
        %v1066 = vrot.slane %v1052, 7
        %v1067 = vrot.slane %v1055, 7
        %v1068 = vsel %vm736, %v1056, %v1060
        %v1069 = vsel %vm736, %v1057, %v1061
        %v1070 = vsel %vm736, %v1058, %v1062
        %v1071 = vsel %vm736, %v1059, %v1063
        %v1072 = vsel %vm736, %v1064, %v1056
        %v1073 = vsel %vm736, %v1065, %v1057
        %v1074 = vsel %vm736, %v1066, %v1058
        %v1075 = vsel %vm736, %v1067, %v1059
        %v1076 = vmul.f32 %v1072, %v745
        %v1077 = vmul.f32 %v1068, %v745
        %v1078 = vmul.f32 %v1073, %v745
        %v1079 = vmul.f32 %v1069, %v745
        %v1080 = vmul.f32 %v1074, %v745
        %v1081 = vmul.f32 %v1070, %v745
        %v1082 = vmul.f32 %v1075, %v745
        %v1083 = vmul.f32 %v1071, %v745
        %v1084 = vmul.f32 %v1044, %v754
        %v1085 = vmul.f32 %v1045, %v754
        %v1086 = vmul.f32 %v1047, %v754
        %v1087 = vmul.f32 %v1048, %v754
        %v1088 = vmul.f32 %v1050, %v754
        %v1089 = vmul.f32 %v1051, %v754
        %v1090 = vmul.f32 %v1053, %v754
        %v1091 = vmul.f32 %v1054, %v754
        %v1092 = vadd.f32 %v1076, %v1084
        %v1093 = vadd.f32 %v1077, %v1085
        %v1094 = vadd.f32 %v1078, %v1086
        %v1095 = vadd.f32 %v1079, %v1087
        %v1096 = vadd.f32 %v1080, %v1088
        %v1097 = vadd.f32 %v1081, %v1089
        %v1098 = vadd.f32 %v1082, %v1090
        %v1099 = vadd.f32 %v1083, %v1091
        %v1100 = vrot.slane %v1044, 1
        %v1101 = vrot.slane %v1047, 1
        %v1102 = vrot.slane %v1050, 1
        %v1103 = vrot.slane %v1053, 1
        %v1104 = vrot.slane %v1045, 1
        %v1105 = vrot.slane %v1048, 1
        %v1106 = vrot.slane %v1051, 1
        %v1107 = vrot.slane %v1054, 1
        %v1108 = vrot.slane %v1046, 1
        %v1109 = vrot.slane %v1049, 1
        %v1110 = vrot.slane %v1052, 1
        %v1111 = vrot.slane %v1055, 1
        %v1112 = vsel %vm783, %v1104, %v1108
        %v1113 = vsel %vm783, %v1105, %v1109
        %v1114 = vsel %vm783, %v1106, %v1110
        %v1115 = vsel %vm783, %v1107, %v1111
        %v1116 = vsel %vm783, %v1100, %v1104
        %v1117 = vsel %vm783, %v1101, %v1105
        %v1118 = vsel %vm783, %v1102, %v1106
        %v1119 = vsel %vm783, %v1103, %v1107
        %v1120 = vmul.f32 %v1116, %v792
        %v1121 = vmul.f32 %v1112, %v792
        %v1122 = vmul.f32 %v1117, %v792
        %v1123 = vmul.f32 %v1113, %v792
        %v1124 = vmul.f32 %v1118, %v792
        %v1125 = vmul.f32 %v1114, %v792
        %v1126 = vmul.f32 %v1119, %v792
        %v1127 = vmul.f32 %v1115, %v792
        %v1128 = vadd.f32 %v1092, %v1120
        %v1129 = vadd.f32 %v1093, %v1121
        %v1130 = vadd.f32 %v1094, %v1122
        %v1131 = vadd.f32 %v1095, %v1123
        %v1132 = vadd.f32 %v1096, %v1124
        %v1133 = vadd.f32 %v1097, %v1125
        %v1134 = vadd.f32 %v1098, %v1126
        %v1135 = vadd.f32 %v1099, %v1127
        %s1136 = scalar_lea.vmem [#allocation2], 120
        %v1137 = vld [vmem:[%s1136] sm:$0xff]
        %v1138 = vld [vmem:[%s1136 + $0x8] sm:$0xff]
        %v1139 = vld [vmem:[%s1136 + $0x10] sm:$0xff]
        %v1140 = vld [vmem:[%s1136 + $0x18] sm:$0xff]
        %v1141 = vld [vmem:[%s1136 + $0x20] sm:$0xff]
        %v1142 = vld [vmem:[%s1136 + $0x28] sm:$0xff]
        %v1143 = vld [vmem:[%s1136 + $0x30] sm:$0xff]
        %v1144 = vld [vmem:[%s1136 + $0x38] sm:$0xff]
        %v1145 = vld [vmem:[%s1136 + $0x40] sm:$0xff]
        %v1146 = vld [vmem:[%s1136 + $0x48] sm:$0xff]
        %v1147 = vld [vmem:[%s1136 + $0x50] sm:$0xff]
        %v1148 = vld [vmem:[%s1136 + $0x58] sm:$0xff]
        %v1149 = vrot.slane %v1137, 7
        %v1150 = vrot.slane %v1140, 7
        %v1151 = vrot.slane %v1143, 7
        %v1152 = vrot.slane %v1146, 7
        %v1153 = vrot.slane %v1138, 7
        %v1154 = vrot.slane %v1141, 7
        %v1155 = vrot.slane %v1144, 7
        %v1156 = vrot.slane %v1147, 7
        %v1157 = vrot.slane %v1139, 7
        %v1158 = vrot.slane %v1142, 7
        %v1159 = vrot.slane %v1145, 7
        %v1160 = vrot.slane %v1148, 7
        %v1161 = vsel %vm736, %v1149, %v1153
        %v1162 = vsel %vm736, %v1150, %v1154
        %v1163 = vsel %vm736, %v1151, %v1155
        %v1164 = vsel %vm736, %v1152, %v1156
        %v1165 = vsel %vm736, %v1157, %v1149
        %v1166 = vsel %vm736, %v1158, %v1150
        %v1167 = vsel %vm736, %v1159, %v1151
        %v1168 = vsel %vm736, %v1160, %v1152
        %v1169 = vmul.f32 %v1165, %v841
        %v1170 = vmul.f32 %v1161, %v841
        %v1171 = vmul.f32 %v1166, %v841
        %v1172 = vmul.f32 %v1162, %v841
        %v1173 = vmul.f32 %v1167, %v841
        %v1174 = vmul.f32 %v1163, %v841
        %v1175 = vmul.f32 %v1168, %v841
        %v1176 = vmul.f32 %v1164, %v841
        %v1177 = vadd.f32 %v1128, %v1169
        %v1178 = vadd.f32 %v1129, %v1170
        %v1179 = vadd.f32 %v1130, %v1171
        %v1180 = vadd.f32 %v1131, %v1172
        %v1181 = vadd.f32 %v1132, %v1173
        %v1182 = vadd.f32 %v1133, %v1174
        %v1183 = vadd.f32 %v1134, %v1175
        %v1184 = vadd.f32 %v1135, %v1176
        %v1185 = vmul.f32 %v1137, %v858
        %v1186 = vmul.f32 %v1138, %v858
        %v1187 = vmul.f32 %v1140, %v858
        %v1188 = vmul.f32 %v1141, %v858
        %v1189 = vmul.f32 %v1143, %v858
        %v1190 = vmul.f32 %v1144, %v858
        %v1191 = vmul.f32 %v1146, %v858
        %v1192 = vmul.f32 %v1147, %v858
        %v1193 = vadd.f32 %v1177, %v1185
        %v1194 = vadd.f32 %v1178, %v1186
        %v1195 = vadd.f32 %v1179, %v1187
        %v1196 = vadd.f32 %v1180, %v1188
        %v1197 = vadd.f32 %v1181, %v1189
        %v1198 = vadd.f32 %v1182, %v1190
        %v1199 = vadd.f32 %v1183, %v1191
        %v1200 = vadd.f32 %v1184, %v1192
        %v1201 = vrot.slane %v1137, 1
        %v1202 = vrot.slane %v1140, 1
        %v1203 = vrot.slane %v1143, 1
        %v1204 = vrot.slane %v1146, 1
        %v1205 = vrot.slane %v1138, 1
        %v1206 = vrot.slane %v1141, 1
        %v1207 = vrot.slane %v1144, 1
        %v1208 = vrot.slane %v1147, 1
        %v1209 = vrot.slane %v1139, 1
        %v1210 = vrot.slane %v1142, 1
        %v1211 = vrot.slane %v1145, 1
        %v1212 = vrot.slane %v1148, 1
        %v1213 = vsel %vm783, %v1205, %v1209
        %v1214 = vsel %vm783, %v1206, %v1210
        %v1215 = vsel %vm783, %v1207, %v1211
        %v1216 = vsel %vm783, %v1208, %v1212
        %v1217 = vsel %vm783, %v1201, %v1205
        %v1218 = vsel %vm783, %v1202, %v1206
        %v1219 = vsel %vm783, %v1203, %v1207
        %v1220 = vsel %vm783, %v1204, %v1208
        %v1221 = vmul.f32 %v1217, %v895
        %v1222 = vmul.f32 %v1213, %v895
        %v1223 = vmul.f32 %v1218, %v895
        %v1224 = vmul.f32 %v1214, %v895
        %v1225 = vmul.f32 %v1219, %v895
        %v1226 = vmul.f32 %v1215, %v895
        %v1227 = vmul.f32 %v1220, %v895
        %v1228 = vmul.f32 %v1216, %v895
        %v1229 = vadd.f32 %v1193, %v1221
        %v1230 = vadd.f32 %v1194, %v1222
        %v1231 = vadd.f32 %v1195, %v1223
        %v1232 = vadd.f32 %v1196, %v1224
        %v1233 = vadd.f32 %v1197, %v1225
        %v1234 = vadd.f32 %v1198, %v1226
        %v1235 = vadd.f32 %v1199, %v1227
        %v1236 = vadd.f32 %v1200, %v1228
        %s1237 = scalar_lea.vmem [#allocation2], 144
        %v1238 = vld [vmem:[%s1237] sm:$0xff]
        %v1239 = vld [vmem:[%s1237 + $0x8] sm:$0xff]
        %v1240 = vld [vmem:[%s1237 + $0x10] sm:$0xff]
        %v1241 = vld [vmem:[%s1237 + $0x18] sm:$0xff]
        %v1242 = vld [vmem:[%s1237 + $0x20] sm:$0xff]
        %v1243 = vld [vmem:[%s1237 + $0x28] sm:$0xff]
        %v1244 = vld [vmem:[%s1237 + $0x30] sm:$0xff]
        %v1245 = vld [vmem:[%s1237 + $0x38] sm:$0xff]
        %v1246 = vld [vmem:[%s1237 + $0x40] sm:$0xff]
        %v1247 = vld [vmem:[%s1237 + $0x48] sm:$0xff]
        %v1248 = vld [vmem:[%s1237 + $0x50] sm:$0xff]
        %v1249 = vld [vmem:[%s1237 + $0x58] sm:$0xff]
        %v1250 = vrot.slane %v1238, 7
        %v1251 = vrot.slane %v1241, 7
        %v1252 = vrot.slane %v1244, 7
        %v1253 = vrot.slane %v1247, 7
        %v1254 = vrot.slane %v1239, 7
        %v1255 = vrot.slane %v1242, 7
        %v1256 = vrot.slane %v1245, 7
        %v1257 = vrot.slane %v1248, 7
        %v1258 = vrot.slane %v1240, 7
        %v1259 = vrot.slane %v1243, 7
        %v1260 = vrot.slane %v1246, 7
        %v1261 = vrot.slane %v1249, 7
        %v1262 = vsel %vm736, %v1250, %v1254
        %v1263 = vsel %vm736, %v1251, %v1255
        %v1264 = vsel %vm736, %v1252, %v1256
        %v1265 = vsel %vm736, %v1253, %v1257
        %v1266 = vsel %vm736, %v1258, %v1250
        %v1267 = vsel %vm736, %v1259, %v1251
        %v1268 = vsel %vm736, %v1260, %v1252
        %v1269 = vsel %vm736, %v1261, %v1253
        %v1270 = vmul.f32 %v1266, %v945
        %v1271 = vmul.f32 %v1262, %v945
        %v1272 = vmul.f32 %v1267, %v945
        %v1273 = vmul.f32 %v1263, %v945
        %v1274 = vmul.f32 %v1268, %v945
        %v1275 = vmul.f32 %v1264, %v945
        %v1276 = vmul.f32 %v1269, %v945
        %v1277 = vmul.f32 %v1265, %v945
        %v1278 = vadd.f32 %v1229, %v1270
        %v1279 = vadd.f32 %v1230, %v1271
        %v1280 = vadd.f32 %v1231, %v1272
        %v1281 = vadd.f32 %v1232, %v1273
        %v1282 = vadd.f32 %v1233, %v1274
        %v1283 = vadd.f32 %v1234, %v1275
        %v1284 = vadd.f32 %v1235, %v1276
        %v1285 = vadd.f32 %v1236, %v1277
        %v1286 = vmul.f32 %v1238, %v962
        %v1287 = vmul.f32 %v1239, %v962
        %v1288 = vmul.f32 %v1241, %v962
        %v1289 = vmul.f32 %v1242, %v962
        %v1290 = vmul.f32 %v1244, %v962
        %v1291 = vmul.f32 %v1245, %v962
        %v1292 = vmul.f32 %v1247, %v962
        %v1293 = vmul.f32 %v1248, %v962
        %v1294 = vadd.f32 %v1278, %v1286
        %v1295 = vadd.f32 %v1279, %v1287
        %v1296 = vadd.f32 %v1280, %v1288
        %v1297 = vadd.f32 %v1281, %v1289
        %v1298 = vadd.f32 %v1282, %v1290
        %v1299 = vadd.f32 %v1283, %v1291
        %v1300 = vadd.f32 %v1284, %v1292
        %v1301 = vadd.f32 %v1285, %v1293
        %v1302 = vrot.slane %v1238, 1
        %v1303 = vrot.slane %v1241, 1
        %v1304 = vrot.slane %v1244, 1
        %v1305 = vrot.slane %v1247, 1
        %v1306 = vrot.slane %v1239, 1
        %v1307 = vrot.slane %v1242, 1
        %v1308 = vrot.slane %v1245, 1
        %v1309 = vrot.slane %v1248, 1
        %v1310 = vrot.slane %v1240, 1
        %v1311 = vrot.slane %v1243, 1
        %v1312 = vrot.slane %v1246, 1
        %v1313 = vrot.slane %v1249, 1
        %v1314 = vsel %vm783, %v1306, %v1310
        %v1315 = vsel %vm783, %v1307, %v1311
        %v1316 = vsel %vm783, %v1308, %v1312
        %v1317 = vsel %vm783, %v1309, %v1313
        %v1318 = vsel %vm783, %v1302, %v1306
        %v1319 = vsel %vm783, %v1303, %v1307
        %v1320 = vsel %vm783, %v1304, %v1308
        %v1321 = vsel %vm783, %v1305, %v1309
        %v1322 = vmul.f32 %v1318, %v999
        %v1323 = vmul.f32 %v1314, %v999
        %v1324 = vmul.f32 %v1319, %v999
        %v1325 = vmul.f32 %v1315, %v999
        %v1326 = vmul.f32 %v1320, %v999
        %v1327 = vmul.f32 %v1316, %v999
        %v1328 = vmul.f32 %v1321, %v999
        %v1329 = vmul.f32 %v1317, %v999
        %v1330 = vadd.f32 %v1294, %v1322
        %v1331 = vadd.f32 %v1295, %v1323
        %v1332 = vadd.f32 %v1296, %v1324
        %v1333 = vadd.f32 %v1297, %v1325
        %v1334 = vadd.f32 %v1298, %v1326
        %v1335 = vadd.f32 %v1299, %v1327
        %v1336 = vadd.f32 %v1300, %v1328
        %v1337 = vadd.f32 %v1301, %v1329
        %v1338 = vadd.f32 %v1330, %v1017
        %v1339 = vadd.f32 %v1331, %v1017
        %v1340 = vadd.f32 %v1332, %v1017
        %v1341 = vadd.f32 %v1333, %v1017
        %v1342 = vadd.f32 %v1334, %v1017
        %v1343 = vadd.f32 %v1335, %v1017
        %v1344 = vadd.f32 %v1336, %v1017
        %v1345 = vadd.f32 %v1337, %v1017
        %v1346 = vmax.f32 %v1338, 0.0
        %v1347 = vmax.f32 %v1339, 0.0
        %v1348 = vmax.f32 %v1340, 0.0
        %v1349 = vmax.f32 %v1341, 0.0
        %v1350 = vmax.f32 %v1342, 0.0
        %v1351 = vmax.f32 %v1343, 0.0
        %v1352 = vmax.f32 %v1344, 0.0
        %v1353 = vmax.f32 %v1345, 0.0
        %s1354 = scalar_lea.vmem %s291, 64 [#allocation9]
        %1355 = vst [vmem:[%s1354] sm:$0xff] %v1346
        %1356 = vst [vmem:[%s1354 + $0x8] sm:$0xff] %v1347
        %1357 = vst [vmem:[%s1354 + $0x10] sm:$0xff] %v1348
        %1358 = vst [vmem:[%s1354 + $0x18] sm:$0xff] %v1349
        %1359 = vst [vmem:[%s1354 + $0x20] sm:$0xff] %v1350
        %1360 = vst [vmem:[%s1354 + $0x28] sm:$0xff] %v1351
        %1361 = vst [vmem:[%s1354 + $0x30] sm:$0xff] %v1352
        %1362 = vst [vmem:[%s1354 + $0x38] sm:$0xff] %v1353
        %s1363 = scalar_lea.vmem [#allocation2], 192
        %v1364 = vld [vmem:[%s1363] sm:$0xff]
        %v1365 = vld [vmem:[%s1363 + $0x8] sm:$0xff]
        %v1366 = vld [vmem:[%s1363 + $0x10] sm:$0xff]
        %v1367 = vld [vmem:[%s1363 + $0x18] sm:$0xff]
        %v1368 = vld [vmem:[%s1363 + $0x20] sm:$0xff]
        %v1369 = vld [vmem:[%s1363 + $0x28] sm:$0xff]
        %v1370 = vld [vmem:[%s1363 + $0x30] sm:$0xff]
        %v1371 = vld [vmem:[%s1363 + $0x38] sm:$0xff]
        %v1372 = vld [vmem:[%s1363 + $0x40] sm:$0xff]
        %v1373 = vld [vmem:[%s1363 + $0x48] sm:$0xff]
        %v1374 = vld [vmem:[%s1363 + $0x50] sm:$0xff]
        %v1375 = vld [vmem:[%s1363 + $0x58] sm:$0xff]
        %v1376 = vrot.slane %v1364, 7
        %v1377 = vrot.slane %v1367, 7
        %v1378 = vrot.slane %v1370, 7
        %v1379 = vrot.slane %v1373, 7
        %v1380 = vrot.slane %v1365, 7
        %v1381 = vrot.slane %v1368, 7
        %v1382 = vrot.slane %v1371, 7
        %v1383 = vrot.slane %v1374, 7
        %v1384 = vrot.slane %v1366, 7
        %v1385 = vrot.slane %v1369, 7
        %v1386 = vrot.slane %v1372, 7
        %v1387 = vrot.slane %v1375, 7
        %v1388 = vsel %vm736, %v1376, %v1380
        %v1389 = vsel %vm736, %v1377, %v1381
        %v1390 = vsel %vm736, %v1378, %v1382
        %v1391 = vsel %vm736, %v1379, %v1383
        %v1392 = vsel %vm736, %v1384, %v1376
        %v1393 = vsel %vm736, %v1385, %v1377
        %v1394 = vsel %vm736, %v1386, %v1378
        %v1395 = vsel %vm736, %v1387, %v1379
        %v1396 = vmul.f32 %v1392, %v745
        %v1397 = vmul.f32 %v1388, %v745
        %v1398 = vmul.f32 %v1393, %v745
        %v1399 = vmul.f32 %v1389, %v745
        %v1400 = vmul.f32 %v1394, %v745
        %v1401 = vmul.f32 %v1390, %v745
        %v1402 = vmul.f32 %v1395, %v745
        %v1403 = vmul.f32 %v1391, %v745
        %v1404 = vmul.f32 %v1364, %v754
        %v1405 = vmul.f32 %v1365, %v754
        %v1406 = vmul.f32 %v1367, %v754
        %v1407 = vmul.f32 %v1368, %v754
        %v1408 = vmul.f32 %v1370, %v754
        %v1409 = vmul.f32 %v1371, %v754
        %v1410 = vmul.f32 %v1373, %v754
        %v1411 = vmul.f32 %v1374, %v754
        %v1412 = vadd.f32 %v1396, %v1404
        %v1413 = vadd.f32 %v1397, %v1405
        %v1414 = vadd.f32 %v1398, %v1406
        %v1415 = vadd.f32 %v1399, %v1407
        %v1416 = vadd.f32 %v1400, %v1408
        %v1417 = vadd.f32 %v1401, %v1409
        %v1418 = vadd.f32 %v1402, %v1410
        %v1419 = vadd.f32 %v1403, %v1411
        %v1420 = vrot.slane %v1364, 1
        %v1421 = vrot.slane %v1367, 1
        %v1422 = vrot.slane %v1370, 1
        %v1423 = vrot.slane %v1373, 1
        %v1424 = vrot.slane %v1365, 1
        %v1425 = vrot.slane %v1368, 1
        %v1426 = vrot.slane %v1371, 1
        %v1427 = vrot.slane %v1374, 1
        %v1428 = vrot.slane %v1366, 1
        %v1429 = vrot.slane %v1369, 1
        %v1430 = vrot.slane %v1372, 1
        %v1431 = vrot.slane %v1375, 1
        %v1432 = vsel %vm783, %v1424, %v1428
        %v1433 = vsel %vm783, %v1425, %v1429
        %v1434 = vsel %vm783, %v1426, %v1430
        %v1435 = vsel %vm783, %v1427, %v1431
        %v1436 = vsel %vm783, %v1420, %v1424
        %v1437 = vsel %vm783, %v1421, %v1425
        %v1438 = vsel %vm783, %v1422, %v1426
        %v1439 = vsel %vm783, %v1423, %v1427
        %v1440 = vmul.f32 %v1436, %v792
        %v1441 = vmul.f32 %v1432, %v792
        %v1442 = vmul.f32 %v1437, %v792
        %v1443 = vmul.f32 %v1433, %v792
        %v1444 = vmul.f32 %v1438, %v792
        %v1445 = vmul.f32 %v1434, %v792
        %v1446 = vmul.f32 %v1439, %v792
        %v1447 = vmul.f32 %v1435, %v792
        %v1448 = vadd.f32 %v1412, %v1440
        %v1449 = vadd.f32 %v1413, %v1441
        %v1450 = vadd.f32 %v1414, %v1442
        %v1451 = vadd.f32 %v1415, %v1443
        %v1452 = vadd.f32 %v1416, %v1444
        %v1453 = vadd.f32 %v1417, %v1445
        %v1454 = vadd.f32 %v1418, %v1446
        %v1455 = vadd.f32 %v1419, %v1447
        %s1456 = scalar_lea.vmem [#allocation2], 216
        %v1457 = vld [vmem:[%s1456] sm:$0xff]
        %v1458 = vld [vmem:[%s1456 + $0x8] sm:$0xff]
        %v1459 = vld [vmem:[%s1456 + $0x10] sm:$0xff]
        %v1460 = vld [vmem:[%s1456 + $0x18] sm:$0xff]
        %v1461 = vld [vmem:[%s1456 + $0x20] sm:$0xff]
        %v1462 = vld [vmem:[%s1456 + $0x28] sm:$0xff]
        %v1463 = vld [vmem:[%s1456 + $0x30] sm:$0xff]
        %v1464 = vld [vmem:[%s1456 + $0x38] sm:$0xff]
        %v1465 = vld [vmem:[%s1456 + $0x40] sm:$0xff]
        %v1466 = vld [vmem:[%s1456 + $0x48] sm:$0xff]
        %v1467 = vld [vmem:[%s1456 + $0x50] sm:$0xff]
        %v1468 = vld [vmem:[%s1456 + $0x58] sm:$0xff]
        %v1469 = vrot.slane %v1457, 7
        %v1470 = vrot.slane %v1460, 7
        %v1471 = vrot.slane %v1463, 7
        %v1472 = vrot.slane %v1466, 7
        %v1473 = vrot.slane %v1458, 7
        %v1474 = vrot.slane %v1461, 7
        %v1475 = vrot.slane %v1464, 7
        %v1476 = vrot.slane %v1467, 7
        %v1477 = vrot.slane %v1459, 7
        %v1478 = vrot.slane %v1462, 7
        %v1479 = vrot.slane %v1465, 7
        %v1480 = vrot.slane %v1468, 7
        %v1481 = vsel %vm736, %v1469, %v1473
        %v1482 = vsel %vm736, %v1470, %v1474
        %v1483 = vsel %vm736, %v1471, %v1475
        %v1484 = vsel %vm736, %v1472, %v1476
        %v1485 = vsel %vm736, %v1477, %v1469
        %v1486 = vsel %vm736, %v1478, %v1470
        %v1487 = vsel %vm736, %v1479, %v1471
        %v1488 = vsel %vm736, %v1480, %v1472
        %v1489 = vmul.f32 %v1485, %v841
        %v1490 = vmul.f32 %v1481, %v841
        %v1491 = vmul.f32 %v1486, %v841
        %v1492 = vmul.f32 %v1482, %v841
        %v1493 = vmul.f32 %v1487, %v841
        %v1494 = vmul.f32 %v1483, %v841
        %v1495 = vmul.f32 %v1488, %v841
        %v1496 = vmul.f32 %v1484, %v841
        %v1497 = vadd.f32 %v1448, %v1489
        %v1498 = vadd.f32 %v1449, %v1490
        %v1499 = vadd.f32 %v1450, %v1491
        %v1500 = vadd.f32 %v1451, %v1492
        %v1501 = vadd.f32 %v1452, %v1493
        %v1502 = vadd.f32 %v1453, %v1494
        %v1503 = vadd.f32 %v1454, %v1495
        %v1504 = vadd.f32 %v1455, %v1496
        %v1505 = vmul.f32 %v1457, %v858
        %v1506 = vmul.f32 %v1458, %v858
        %v1507 = vmul.f32 %v1460, %v858
        %v1508 = vmul.f32 %v1461, %v858
        %v1509 = vmul.f32 %v1463, %v858
        %v1510 = vmul.f32 %v1464, %v858
        %v1511 = vmul.f32 %v1466, %v858
        %v1512 = vmul.f32 %v1467, %v858
        %v1513 = vadd.f32 %v1497, %v1505
        %v1514 = vadd.f32 %v1498, %v1506
        %v1515 = vadd.f32 %v1499, %v1507
        %v1516 = vadd.f32 %v1500, %v1508
        %v1517 = vadd.f32 %v1501, %v1509
        %v1518 = vadd.f32 %v1502, %v1510
        %v1519 = vadd.f32 %v1503, %v1511
        %v1520 = vadd.f32 %v1504, %v1512
        %v1521 = vrot.slane %v1457, 1
        %v1522 = vrot.slane %v1460, 1
        %v1523 = vrot.slane %v1463, 1
        %v1524 = vrot.slane %v1466, 1
        %v1525 = vrot.slane %v1458, 1
        %v1526 = vrot.slane %v1461, 1
        %v1527 = vrot.slane %v1464, 1
        %v1528 = vrot.slane %v1467, 1
        %v1529 = vrot.slane %v1459, 1
        %v1530 = vrot.slane %v1462, 1
        %v1531 = vrot.slane %v1465, 1
        %v1532 = vrot.slane %v1468, 1
        %v1533 = vsel %vm783, %v1525, %v1529
        %v1534 = vsel %vm783, %v1526, %v1530
        %v1535 = vsel %vm783, %v1527, %v1531
        %v1536 = vsel %vm783, %v1528, %v1532
        %v1537 = vsel %vm783, %v1521, %v1525
        %v1538 = vsel %vm783, %v1522, %v1526
        %v1539 = vsel %vm783, %v1523, %v1527
        %v1540 = vsel %vm783, %v1524, %v1528
        %v1541 = vmul.f32 %v1537, %v895
        %v1542 = vmul.f32 %v1533, %v895
        %v1543 = vmul.f32 %v1538, %v895
        %v1544 = vmul.f32 %v1534, %v895
        %v1545 = vmul.f32 %v1539, %v895
        %v1546 = vmul.f32 %v1535, %v895
        %v1547 = vmul.f32 %v1540, %v895
        %v1548 = vmul.f32 %v1536, %v895
        %v1549 = vadd.f32 %v1513, %v1541
        %v1550 = vadd.f32 %v1514, %v1542
        %v1551 = vadd.f32 %v1515, %v1543
        %v1552 = vadd.f32 %v1516, %v1544
        %v1553 = vadd.f32 %v1517, %v1545
        %v1554 = vadd.f32 %v1518, %v1546
        %v1555 = vadd.f32 %v1519, %v1547
        %v1556 = vadd.f32 %v1520, %v1548
        %s1557 = scalar_lea.vmem [#allocation2], 240
        %v1558 = vld [vmem:[%s1557] sm:$0xff]
        %v1559 = vld [vmem:[%s1557 + $0x8] sm:$0xff]
        %v1560 = vld [vmem:[%s1557 + $0x10] sm:$0xff]
        %v1561 = vld [vmem:[%s1557 + $0x18] sm:$0xff]
        %v1562 = vld [vmem:[%s1557 + $0x20] sm:$0xff]
        %v1563 = vld [vmem:[%s1557 + $0x28] sm:$0xff]
        %v1564 = vld [vmem:[%s1557 + $0x30] sm:$0xff]
        %v1565 = vld [vmem:[%s1557 + $0x38] sm:$0xff]
        %v1566 = vld [vmem:[%s1557 + $0x40] sm:$0xff]
        %v1567 = vld [vmem:[%s1557 + $0x48] sm:$0xff]
        %v1568 = vld [vmem:[%s1557 + $0x50] sm:$0xff]
        %v1569 = vld [vmem:[%s1557 + $0x58] sm:$0xff]
        %v1570 = vrot.slane %v1558, 7
        %v1571 = vrot.slane %v1561, 7
        %v1572 = vrot.slane %v1564, 7
        %v1573 = vrot.slane %v1567, 7
        %v1574 = vrot.slane %v1559, 7
        %v1575 = vrot.slane %v1562, 7
        %v1576 = vrot.slane %v1565, 7
        %v1577 = vrot.slane %v1568, 7
        %v1578 = vrot.slane %v1560, 7
        %v1579 = vrot.slane %v1563, 7
        %v1580 = vrot.slane %v1566, 7
        %v1581 = vrot.slane %v1569, 7
        %v1582 = vsel %vm736, %v1570, %v1574
        %v1583 = vsel %vm736, %v1571, %v1575
        %v1584 = vsel %vm736, %v1572, %v1576
        %v1585 = vsel %vm736, %v1573, %v1577
        %v1586 = vsel %vm736, %v1578, %v1570
        %v1587 = vsel %vm736, %v1579, %v1571
        %v1588 = vsel %vm736, %v1580, %v1572
        %v1589 = vsel %vm736, %v1581, %v1573
        %v1590 = vmul.f32 %v1586, %v945
        %v1591 = vmul.f32 %v1582, %v945
        %v1592 = vmul.f32 %v1587, %v945
        %v1593 = vmul.f32 %v1583, %v945
        %v1594 = vmul.f32 %v1588, %v945
        %v1595 = vmul.f32 %v1584, %v945
        %v1596 = vmul.f32 %v1589, %v945
        %v1597 = vmul.f32 %v1585, %v945
        %v1598 = vadd.f32 %v1549, %v1590
        %v1599 = vadd.f32 %v1550, %v1591
        %v1600 = vadd.f32 %v1551, %v1592
        %v1601 = vadd.f32 %v1552, %v1593
        %v1602 = vadd.f32 %v1553, %v1594
        %v1603 = vadd.f32 %v1554, %v1595
        %v1604 = vadd.f32 %v1555, %v1596
        %v1605 = vadd.f32 %v1556, %v1597
        %v1606 = vmul.f32 %v1558, %v962
        %v1607 = vmul.f32 %v1559, %v962
        %v1608 = vmul.f32 %v1561, %v962
        %v1609 = vmul.f32 %v1562, %v962
        %v1610 = vmul.f32 %v1564, %v962
        %v1611 = vmul.f32 %v1565, %v962
        %v1612 = vmul.f32 %v1567, %v962
        %v1613 = vmul.f32 %v1568, %v962
        %v1614 = vadd.f32 %v1598, %v1606
        %v1615 = vadd.f32 %v1599, %v1607
        %v1616 = vadd.f32 %v1600, %v1608
        %v1617 = vadd.f32 %v1601, %v1609
        %v1618 = vadd.f32 %v1602, %v1610
        %v1619 = vadd.f32 %v1603, %v1611
        %v1620 = vadd.f32 %v1604, %v1612
        %v1621 = vadd.f32 %v1605, %v1613
        %v1622 = vrot.slane %v1558, 1
        %v1623 = vrot.slane %v1561, 1
        %v1624 = vrot.slane %v1564, 1
        %v1625 = vrot.slane %v1567, 1
        %v1626 = vrot.slane %v1559, 1
        %v1627 = vrot.slane %v1562, 1
        %v1628 = vrot.slane %v1565, 1
        %v1629 = vrot.slane %v1568, 1
        %v1630 = vrot.slane %v1560, 1
        %v1631 = vrot.slane %v1563, 1
        %v1632 = vrot.slane %v1566, 1
        %v1633 = vrot.slane %v1569, 1
        %v1634 = vsel %vm783, %v1626, %v1630
        %v1635 = vsel %vm783, %v1627, %v1631
        %v1636 = vsel %vm783, %v1628, %v1632
        %v1637 = vsel %vm783, %v1629, %v1633
        %v1638 = vsel %vm783, %v1622, %v1626
        %v1639 = vsel %vm783, %v1623, %v1627
        %v1640 = vsel %vm783, %v1624, %v1628
        %v1641 = vsel %vm783, %v1625, %v1629
        %v1642 = vmul.f32 %v1638, %v999
        %v1643 = vmul.f32 %v1634, %v999
        %v1644 = vmul.f32 %v1639, %v999
        %v1645 = vmul.f32 %v1635, %v999
        %v1646 = vmul.f32 %v1640, %v999
        %v1647 = vmul.f32 %v1636, %v999
        %v1648 = vmul.f32 %v1641, %v999
        %v1649 = vmul.f32 %v1637, %v999
        %v1650 = vadd.f32 %v1614, %v1642
        %v1651 = vadd.f32 %v1615, %v1643
        %v1652 = vadd.f32 %v1616, %v1644
        %v1653 = vadd.f32 %v1617, %v1645
        %v1654 = vadd.f32 %v1618, %v1646
        %v1655 = vadd.f32 %v1619, %v1647
        %v1656 = vadd.f32 %v1620, %v1648
        %v1657 = vadd.f32 %v1621, %v1649
        %v1658 = vadd.f32 %v1650, %v1017
        %v1659 = vadd.f32 %v1651, %v1017
        %v1660 = vadd.f32 %v1652, %v1017
        %v1661 = vadd.f32 %v1653, %v1017
        %v1662 = vadd.f32 %v1654, %v1017
        %v1663 = vadd.f32 %v1655, %v1017
        %v1664 = vadd.f32 %v1656, %v1017
        %v1665 = vadd.f32 %v1657, %v1017
        %v1666 = vmax.f32 %v1658, 0.0
        %v1667 = vmax.f32 %v1659, 0.0
        %v1668 = vmax.f32 %v1660, 0.0
        %v1669 = vmax.f32 %v1661, 0.0
        %v1670 = vmax.f32 %v1662, 0.0
        %v1671 = vmax.f32 %v1663, 0.0
        %v1672 = vmax.f32 %v1664, 0.0
        %v1673 = vmax.f32 %v1665, 0.0
        %s1674 = scalar_lea.vmem %s291, 128 [#allocation9]
        %1675 = vst [vmem:[%s1674] sm:$0xff] %v1666
        %1676 = vst [vmem:[%s1674 + $0x8] sm:$0xff] %v1667
        %1677 = vst [vmem:[%s1674 + $0x10] sm:$0xff] %v1668
        %1678 = vst [vmem:[%s1674 + $0x18] sm:$0xff] %v1669
        %1679 = vst [vmem:[%s1674 + $0x20] sm:$0xff] %v1670
        %1680 = vst [vmem:[%s1674 + $0x28] sm:$0xff] %v1671
        %1681 = vst [vmem:[%s1674 + $0x30] sm:$0xff] %v1672
        %1682 = vst [vmem:[%s1674 + $0x38] sm:$0xff] %v1673
        %s1683 = scalar_lea.vmem [#allocation2], 288
        %v1684 = vld [vmem:[%s1683] sm:$0xff]
        %v1685 = vld [vmem:[%s1683 + $0x8] sm:$0xff]
        %v1686 = vld [vmem:[%s1683 + $0x10] sm:$0xff]
        %v1687 = vld [vmem:[%s1683 + $0x18] sm:$0xff]
        %v1688 = vld [vmem:[%s1683 + $0x20] sm:$0xff]
        %v1689 = vld [vmem:[%s1683 + $0x28] sm:$0xff]
        %v1690 = vld [vmem:[%s1683 + $0x30] sm:$0xff]
        %v1691 = vld [vmem:[%s1683 + $0x38] sm:$0xff]
        %v1692 = vld [vmem:[%s1683 + $0x40] sm:$0xff]
        %v1693 = vld [vmem:[%s1683 + $0x48] sm:$0xff]
        %v1694 = vld [vmem:[%s1683 + $0x50] sm:$0xff]
        %v1695 = vld [vmem:[%s1683 + $0x58] sm:$0xff]
        %v1696 = vrot.slane %v1684, 7
        %v1697 = vrot.slane %v1687, 7
        %v1698 = vrot.slane %v1690, 7
        %v1699 = vrot.slane %v1693, 7
        %v1700 = vrot.slane %v1685, 7
        %v1701 = vrot.slane %v1688, 7
        %v1702 = vrot.slane %v1691, 7
        %v1703 = vrot.slane %v1694, 7
        %v1704 = vrot.slane %v1686, 7
        %v1705 = vrot.slane %v1689, 7
        %v1706 = vrot.slane %v1692, 7
        %v1707 = vrot.slane %v1695, 7
        %v1708 = vsel %vm736, %v1696, %v1700
        %v1709 = vsel %vm736, %v1697, %v1701
        %v1710 = vsel %vm736, %v1698, %v1702
        %v1711 = vsel %vm736, %v1699, %v1703
        %v1712 = vsel %vm736, %v1704, %v1696
        %v1713 = vsel %vm736, %v1705, %v1697
        %v1714 = vsel %vm736, %v1706, %v1698
        %v1715 = vsel %vm736, %v1707, %v1699
        %v1716 = vmul.f32 %v1712, %v745
        %v1717 = vmul.f32 %v1708, %v745
        %v1718 = vmul.f32 %v1713, %v745
        %v1719 = vmul.f32 %v1709, %v745
        %v1720 = vmul.f32 %v1714, %v745
        %v1721 = vmul.f32 %v1710, %v745
        %v1722 = vmul.f32 %v1715, %v745
        %v1723 = vmul.f32 %v1711, %v745
        %v1724 = vmul.f32 %v1684, %v754
        %v1725 = vmul.f32 %v1685, %v754
        %v1726 = vmul.f32 %v1687, %v754
        %v1727 = vmul.f32 %v1688, %v754
        %v1728 = vmul.f32 %v1690, %v754
        %v1729 = vmul.f32 %v1691, %v754
        %v1730 = vmul.f32 %v1693, %v754
        %v1731 = vmul.f32 %v1694, %v754
        %v1732 = vadd.f32 %v1716, %v1724
        %v1733 = vadd.f32 %v1717, %v1725
        %v1734 = vadd.f32 %v1718, %v1726
        %v1735 = vadd.f32 %v1719, %v1727
        %v1736 = vadd.f32 %v1720, %v1728
        %v1737 = vadd.f32 %v1721, %v1729
        %v1738 = vadd.f32 %v1722, %v1730
        %v1739 = vadd.f32 %v1723, %v1731
        %v1740 = vrot.slane %v1684, 1
        %v1741 = vrot.slane %v1687, 1
        %v1742 = vrot.slane %v1690, 1
        %v1743 = vrot.slane %v1693, 1
        %v1744 = vrot.slane %v1685, 1
        %v1745 = vrot.slane %v1688, 1
        %v1746 = vrot.slane %v1691, 1
        %v1747 = vrot.slane %v1694, 1
        %v1748 = vrot.slane %v1686, 1
        %v1749 = vrot.slane %v1689, 1
        %v1750 = vrot.slane %v1692, 1
        %v1751 = vrot.slane %v1695, 1
        %v1752 = vsel %vm783, %v1744, %v1748
        %v1753 = vsel %vm783, %v1745, %v1749
        %v1754 = vsel %vm783, %v1746, %v1750
        %v1755 = vsel %vm783, %v1747, %v1751
        %v1756 = vsel %vm783, %v1740, %v1744
        %v1757 = vsel %vm783, %v1741, %v1745
        %v1758 = vsel %vm783, %v1742, %v1746
        %v1759 = vsel %vm783, %v1743, %v1747
        %v1760 = vmul.f32 %v1756, %v792
        %v1761 = vmul.f32 %v1752, %v792
        %v1762 = vmul.f32 %v1757, %v792
        %v1763 = vmul.f32 %v1753, %v792
        %v1764 = vmul.f32 %v1758, %v792
        %v1765 = vmul.f32 %v1754, %v792
        %v1766 = vmul.f32 %v1759, %v792
        %v1767 = vmul.f32 %v1755, %v792
        %v1768 = vadd.f32 %v1732, %v1760
        %v1769 = vadd.f32 %v1733, %v1761
        %v1770 = vadd.f32 %v1734, %v1762
        %v1771 = vadd.f32 %v1735, %v1763
        %v1772 = vadd.f32 %v1736, %v1764
        %v1773 = vadd.f32 %v1737, %v1765
        %v1774 = vadd.f32 %v1738, %v1766
        %v1775 = vadd.f32 %v1739, %v1767
        %s1776 = scalar_lea.vmem [#allocation2], 312
        %v1777 = vld [vmem:[%s1776] sm:$0xff]
        %v1778 = vld [vmem:[%s1776 + $0x8] sm:$0xff]
        %v1779 = vld [vmem:[%s1776 + $0x10] sm:$0xff]
        %v1780 = vld [vmem:[%s1776 + $0x18] sm:$0xff]
        %v1781 = vld [vmem:[%s1776 + $0x20] sm:$0xff]
        %v1782 = vld [vmem:[%s1776 + $0x28] sm:$0xff]
        %v1783 = vld [vmem:[%s1776 + $0x30] sm:$0xff]
        %v1784 = vld [vmem:[%s1776 + $0x38] sm:$0xff]
        %v1785 = vld [vmem:[%s1776 + $0x40] sm:$0xff]
        %v1786 = vld [vmem:[%s1776 + $0x48] sm:$0xff]
        %v1787 = vld [vmem:[%s1776 + $0x50] sm:$0xff]
        %v1788 = vld [vmem:[%s1776 + $0x58] sm:$0xff]
        %v1789 = vrot.slane %v1777, 7
        %v1790 = vrot.slane %v1780, 7
        %v1791 = vrot.slane %v1783, 7
        %v1792 = vrot.slane %v1786, 7
        %v1793 = vrot.slane %v1778, 7
        %v1794 = vrot.slane %v1781, 7
        %v1795 = vrot.slane %v1784, 7
        %v1796 = vrot.slane %v1787, 7
        %v1797 = vrot.slane %v1779, 7
        %v1798 = vrot.slane %v1782, 7
        %v1799 = vrot.slane %v1785, 7
        %v1800 = vrot.slane %v1788, 7
        %v1801 = vsel %vm736, %v1789, %v1793
        %v1802 = vsel %vm736, %v1790, %v1794
        %v1803 = vsel %vm736, %v1791, %v1795
        %v1804 = vsel %vm736, %v1792, %v1796
        %v1805 = vsel %vm736, %v1797, %v1789
        %v1806 = vsel %vm736, %v1798, %v1790
        %v1807 = vsel %vm736, %v1799, %v1791
        %v1808 = vsel %vm736, %v1800, %v1792
        %v1809 = vmul.f32 %v1805, %v841
        %v1810 = vmul.f32 %v1801, %v841
        %v1811 = vmul.f32 %v1806, %v841
        %v1812 = vmul.f32 %v1802, %v841
        %v1813 = vmul.f32 %v1807, %v841
        %v1814 = vmul.f32 %v1803, %v841
        %v1815 = vmul.f32 %v1808, %v841
        %v1816 = vmul.f32 %v1804, %v841
        %v1817 = vadd.f32 %v1768, %v1809
        %v1818 = vadd.f32 %v1769, %v1810
        %v1819 = vadd.f32 %v1770, %v1811
        %v1820 = vadd.f32 %v1771, %v1812
        %v1821 = vadd.f32 %v1772, %v1813
        %v1822 = vadd.f32 %v1773, %v1814
        %v1823 = vadd.f32 %v1774, %v1815
        %v1824 = vadd.f32 %v1775, %v1816
        %v1825 = vmul.f32 %v1777, %v858
        %v1826 = vmul.f32 %v1778, %v858
        %v1827 = vmul.f32 %v1780, %v858
        %v1828 = vmul.f32 %v1781, %v858
        %v1829 = vmul.f32 %v1783, %v858
        %v1830 = vmul.f32 %v1784, %v858
        %v1831 = vmul.f32 %v1786, %v858
        %v1832 = vmul.f32 %v1787, %v858
        %v1833 = vadd.f32 %v1817, %v1825
        %v1834 = vadd.f32 %v1818, %v1826
        %v1835 = vadd.f32 %v1819, %v1827
        %v1836 = vadd.f32 %v1820, %v1828
        %v1837 = vadd.f32 %v1821, %v1829
        %v1838 = vadd.f32 %v1822, %v1830
        %v1839 = vadd.f32 %v1823, %v1831
        %v1840 = vadd.f32 %v1824, %v1832
        %v1841 = vrot.slane %v1777, 1
        %v1842 = vrot.slane %v1780, 1
        %v1843 = vrot.slane %v1783, 1
        %v1844 = vrot.slane %v1786, 1
        %v1845 = vrot.slane %v1778, 1
        %v1846 = vrot.slane %v1781, 1
        %v1847 = vrot.slane %v1784, 1
        %v1848 = vrot.slane %v1787, 1
        %v1849 = vrot.slane %v1779, 1
        %v1850 = vrot.slane %v1782, 1
        %v1851 = vrot.slane %v1785, 1
        %v1852 = vrot.slane %v1788, 1
        %v1853 = vsel %vm783, %v1845, %v1849
        %v1854 = vsel %vm783, %v1846, %v1850
        %v1855 = vsel %vm783, %v1847, %v1851
        %v1856 = vsel %vm783, %v1848, %v1852
        %v1857 = vsel %vm783, %v1841, %v1845
        %v1858 = vsel %vm783, %v1842, %v1846
        %v1859 = vsel %vm783, %v1843, %v1847
        %v1860 = vsel %vm783, %v1844, %v1848
        %v1861 = vmul.f32 %v1857, %v895
        %v1862 = vmul.f32 %v1853, %v895
        %v1863 = vmul.f32 %v1858, %v895
        %v1864 = vmul.f32 %v1854, %v895
        %v1865 = vmul.f32 %v1859, %v895
        %v1866 = vmul.f32 %v1855, %v895
        %v1867 = vmul.f32 %v1860, %v895
        %v1868 = vmul.f32 %v1856, %v895
        %v1869 = vadd.f32 %v1833, %v1861
        %v1870 = vadd.f32 %v1834, %v1862
        %v1871 = vadd.f32 %v1835, %v1863
        %v1872 = vadd.f32 %v1836, %v1864
        %v1873 = vadd.f32 %v1837, %v1865
        %v1874 = vadd.f32 %v1838, %v1866
        %v1875 = vadd.f32 %v1839, %v1867
        %v1876 = vadd.f32 %v1840, %v1868
        %s1877 = scalar_lea.vmem [#allocation2], 336
        %v1878 = vld [vmem:[%s1877] sm:$0xff]
        %v1879 = vld [vmem:[%s1877 + $0x8] sm:$0xff]
        %v1880 = vld [vmem:[%s1877 + $0x10] sm:$0xff]
        %v1881 = vld [vmem:[%s1877 + $0x18] sm:$0xff]
        %v1882 = vld [vmem:[%s1877 + $0x20] sm:$0xff]
        %v1883 = vld [vmem:[%s1877 + $0x28] sm:$0xff]
        %v1884 = vld [vmem:[%s1877 + $0x30] sm:$0xff]
        %v1885 = vld [vmem:[%s1877 + $0x38] sm:$0xff]
        %v1886 = vld [vmem:[%s1877 + $0x40] sm:$0xff]
        %v1887 = vld [vmem:[%s1877 + $0x48] sm:$0xff]
        %v1888 = vld [vmem:[%s1877 + $0x50] sm:$0xff]
        %v1889 = vld [vmem:[%s1877 + $0x58] sm:$0xff]
        %v1890 = vrot.slane %v1878, 7
        %v1891 = vrot.slane %v1881, 7
        %v1892 = vrot.slane %v1884, 7
        %v1893 = vrot.slane %v1887, 7
        %v1894 = vrot.slane %v1879, 7
        %v1895 = vrot.slane %v1882, 7
        %v1896 = vrot.slane %v1885, 7
        %v1897 = vrot.slane %v1888, 7
        %v1898 = vrot.slane %v1880, 7
        %v1899 = vrot.slane %v1883, 7
        %v1900 = vrot.slane %v1886, 7
        %v1901 = vrot.slane %v1889, 7
        %v1902 = vsel %vm736, %v1890, %v1894
        %v1903 = vsel %vm736, %v1891, %v1895
        %v1904 = vsel %vm736, %v1892, %v1896
        %v1905 = vsel %vm736, %v1893, %v1897
        %v1906 = vsel %vm736, %v1898, %v1890
        %v1907 = vsel %vm736, %v1899, %v1891
        %v1908 = vsel %vm736, %v1900, %v1892
        %v1909 = vsel %vm736, %v1901, %v1893
        %v1910 = vmul.f32 %v1906, %v945
        %v1911 = vmul.f32 %v1902, %v945
        %v1912 = vmul.f32 %v1907, %v945
        %v1913 = vmul.f32 %v1903, %v945
        %v1914 = vmul.f32 %v1908, %v945
        %v1915 = vmul.f32 %v1904, %v945
        %v1916 = vmul.f32 %v1909, %v945
        %v1917 = vmul.f32 %v1905, %v945
        %v1918 = vadd.f32 %v1869, %v1910
        %v1919 = vadd.f32 %v1870, %v1911
        %v1920 = vadd.f32 %v1871, %v1912
        %v1921 = vadd.f32 %v1872, %v1913
        %v1922 = vadd.f32 %v1873, %v1914
        %v1923 = vadd.f32 %v1874, %v1915
        %v1924 = vadd.f32 %v1875, %v1916
        %v1925 = vadd.f32 %v1876, %v1917
        %v1926 = vmul.f32 %v1878, %v962
        %v1927 = vmul.f32 %v1879, %v962
        %v1928 = vmul.f32 %v1881, %v962
        %v1929 = vmul.f32 %v1882, %v962
        %v1930 = vmul.f32 %v1884, %v962
        %v1931 = vmul.f32 %v1885, %v962
        %v1932 = vmul.f32 %v1887, %v962
        %v1933 = vmul.f32 %v1888, %v962
        %v1934 = vadd.f32 %v1918, %v1926
        %v1935 = vadd.f32 %v1919, %v1927
        %v1936 = vadd.f32 %v1920, %v1928
        %v1937 = vadd.f32 %v1921, %v1929
        %v1938 = vadd.f32 %v1922, %v1930
        %v1939 = vadd.f32 %v1923, %v1931
        %v1940 = vadd.f32 %v1924, %v1932
        %v1941 = vadd.f32 %v1925, %v1933
        %v1942 = vrot.slane %v1878, 1
        %v1943 = vrot.slane %v1881, 1
        %v1944 = vrot.slane %v1884, 1
        %v1945 = vrot.slane %v1887, 1
        %v1946 = vrot.slane %v1879, 1
        %v1947 = vrot.slane %v1882, 1
        %v1948 = vrot.slane %v1885, 1
        %v1949 = vrot.slane %v1888, 1
        %v1950 = vrot.slane %v1880, 1
        %v1951 = vrot.slane %v1883, 1
        %v1952 = vrot.slane %v1886, 1
        %v1953 = vrot.slane %v1889, 1
        %v1954 = vsel %vm783, %v1946, %v1950
        %v1955 = vsel %vm783, %v1947, %v1951
        %v1956 = vsel %vm783, %v1948, %v1952
        %v1957 = vsel %vm783, %v1949, %v1953
        %v1958 = vsel %vm783, %v1942, %v1946
        %v1959 = vsel %vm783, %v1943, %v1947
        %v1960 = vsel %vm783, %v1944, %v1948
        %v1961 = vsel %vm783, %v1945, %v1949
        %v1962 = vmul.f32 %v1958, %v999
        %v1963 = vmul.f32 %v1954, %v999
        %v1964 = vmul.f32 %v1959, %v999
        %v1965 = vmul.f32 %v1955, %v999
        %v1966 = vmul.f32 %v1960, %v999
        %v1967 = vmul.f32 %v1956, %v999
        %v1968 = vmul.f32 %v1961, %v999
        %v1969 = vmul.f32 %v1957, %v999
        %v1970 = vadd.f32 %v1934, %v1962
        %v1971 = vadd.f32 %v1935, %v1963
        %v1972 = vadd.f32 %v1936, %v1964
        %v1973 = vadd.f32 %v1937, %v1965
        %v1974 = vadd.f32 %v1938, %v1966
        %v1975 = vadd.f32 %v1939, %v1967
        %v1976 = vadd.f32 %v1940, %v1968
        %v1977 = vadd.f32 %v1941, %v1969
        %v1978 = vadd.f32 %v1970, %v1017
        %v1979 = vadd.f32 %v1971, %v1017
        %v1980 = vadd.f32 %v1972, %v1017
        %v1981 = vadd.f32 %v1973, %v1017
        %v1982 = vadd.f32 %v1974, %v1017
        %v1983 = vadd.f32 %v1975, %v1017
        %v1984 = vadd.f32 %v1976, %v1017
        %v1985 = vadd.f32 %v1977, %v1017
        %v1986 = vmax.f32 %v1978, 0.0
        %v1987 = vmax.f32 %v1979, 0.0
        %v1988 = vmax.f32 %v1980, 0.0
        %v1989 = vmax.f32 %v1981, 0.0
        %v1990 = vmax.f32 %v1982, 0.0
        %v1991 = vmax.f32 %v1983, 0.0
        %v1992 = vmax.f32 %v1984, 0.0
        %v1993 = vmax.f32 %v1985, 0.0
        %s1994 = scalar_lea.vmem %s291, 192 [#allocation9]
        %1995 = vst [vmem:[%s1994] sm:$0xff] %v1986
        %1996 = vst [vmem:[%s1994 + $0x8] sm:$0xff] %v1987
        %1997 = vst [vmem:[%s1994 + $0x10] sm:$0xff] %v1988
        %1998 = vst [vmem:[%s1994 + $0x18] sm:$0xff] %v1989
        %1999 = vst [vmem:[%s1994 + $0x20] sm:$0xff] %v1990
        %2000 = vst [vmem:[%s1994 + $0x28] sm:$0xff] %v1991
        %2001 = vst [vmem:[%s1994 + $0x30] sm:$0xff] %v1992
        %2002 = vst [vmem:[%s1994 + $0x38] sm:$0xff] %v1993
        %s2003 = sand.u32 %s155, 1
        %s2004 = scalar_lea.sflag [#allocation5], %s2003
        %s2005 = sand.u32 %s155, 1
        %s2006 = smul.addr %s2005, 256
        %s2007 = scalar_lea.vmem [#allocation9], %s2006
        // Predicated region
        $region65: #{tpu_custom_call.1} parent=39 // pred_check
          %p2008 = pneg %p165
        $region66: #{tpu_custom_call.1} parent=39 // pred_check_branch
          %2010 = sbr.rel (%p2008) target = $region68
        $region67: #{tpu_custom_call.1} parent=39 // pred_region
          %s2011 = smul.u32 16, %s28
          %2013 = vsyncadd %s2004, 0
          %s2014 = smul.addr %s2011, 2
          %s2015 = smul.addr %s27, 32
          %s2016 = sadd.s32 %s2014, %s2015
          %s2017 = smul.addr %s2016, 8
          %s2018 = scalar_lea.hbm %s5, %s2017
          %s2019 = sshll.u32 %s2007, 4
          %s2020 = int_to_ptr.vmem [resolvable:$true] %s2019
          %s2021 = sshll.u32 %s2018, 4
          %s2022 = int_to_ptr.hbm [resolvable:$true] %s2021
          %2027 = dma.vmem_to_hbm [thread:$0]  %s2020, 4096, %s2022, %s2004, 128, 128, 8
        $region68: #{tpu_custom_call.1} parent=39 // pred_fallthru
          _
      $region40: #{tpu_custom_call.1} parent=5 // pred_fallthru
        _
      %p2028 = scmp.le.s32.totalorder 2, %s18
      // Predicated region
      $region69: #{tpu_custom_call.1} parent=5 // pred_check
        %p2029 = pneg %p2028
      $region70: #{tpu_custom_call.1} parent=5 // pred_check_branch
        %2031 = sbr.rel (%p2029) target = $region72
      $region71: #{tpu_custom_call.1} parent=5 // pred_region
        %s2032 = ssub.s32 %s18, 2
        // Predicated region
        $region73: #{tpu_custom_call.1} parent=71 // pred_check
          %p2033 = pneg %p171
        $region74: #{tpu_custom_call.1} parent=71 // pred_check_branch
          %2035 = sbr.rel (%p2033) target = $region76
        $region75: #{tpu_custom_call.1} parent=71 // pred_region
          %s2036 = sand.u32 %s156, 1
          %s2037 = scalar_lea.sflag [#allocation5], %s2036
          %s2038 = sand.u32 %s156, 1
          %s2039 = smul.addr %s2038, 256
          %s2040 = scalar_lea.vmem [#allocation9], %s2039
          %2042 = dma.done %s2037, 4096
        $region76: #{tpu_custom_call.1} parent=71 // pred_fallthru
          _
      $region72: #{tpu_custom_call.1} parent=5 // pred_fallthru
        _
    $region6: #{tpu_custom_call.1} parent=1 // loop_footer
      %s22 = sadd.s32 1, %s18
    $region7: #{tpu_custom_call.1} parent=1 // loop_footer_branch
      %17 = sbr.rel target = $region3
    $region8: #{tpu_custom_call.1} parent=1 // loop_exit
      _
    %2043 = vsyncpa [#allocation4], 1
    %s2044 = scalar_lea.sflag [#allocation4], 1
    %2045 = vsyncpa %s2044, 1
    %2046 = vsyncpa [#allocation7], 1
    %2047 = vsyncpa [#allocation5], 1
    %s2048 = scalar_lea.sflag [#allocation5], 1
    %2049 = vsyncpa %s2048, 1

</llo_original>
